<compile_context>
chip_gen: v6e
topology: v6e:2x2x1
jax: 0.10.0
libtpu: 0.0.40
codegen_flags: <defaults>
</compile_context>

<pallas_src>
import functools

import jax
import jax.numpy as jnp
from jax import lax
from jax.experimental import pallas as pl
from jax.experimental.pallas import tpu as pltpu


def clip_attention_mkv_pallas(hidden_states, attn_mask, params, *, num_heads, multiplier,
                              q_tile=128, compute_dtype=jnp.bfloat16,
                              vmem_limit_bytes=None):
    """hidden_states: (B, T, E); attn_mask: (B, 1, T, T) additive mask (src_len0 == T)."""
    B, T, E = hidden_states.shape
    NH = num_heads
    M = multiplier
    HD = E // NH
    assert NH * HD == E, "embed_dim must be divisible by num_heads"
    scale = HD ** (-0.5)

    # Query tiling: tile the target-sequence axis when it divides evenly, else one tile.
    TQ = q_tile if (T % q_tile == 0) else T
    NQ = T // TQ

    wq, bq, wk, bk, wv, bv, wo, bo = params
    f32 = jnp.float32
    cdt = compute_dtype
    use_approx = jnp.dtype(compute_dtype) != jnp.dtype(jnp.float32)

    # ---- parameter prep (wrapper-side, once per call) -------------------------------
    # Fold the attention scale into the q projection.
    wq_s = wq * scale
    bq_s = bq * scale
    # Head-major repack so each grid step slices contiguous per-head blocks.
    #   wq:  (E, E)      column = h*HD + d           -> (NH, E, HD)
    #   wk:  (E, E*M)    column = m*E + h*HD + d     -> (NH, E, M*HD)   (inner: m*HD + d)
    #   wo:  (E, E)      row    = h*HD + d           -> (NH, HD, E)
    wq3 = wq_s.reshape(E, NH, HD).transpose(1, 0, 2)                               # (NH, E, HD)
    bq3 = bq_s.reshape(1, NH, HD).transpose(1, 0, 2)                               # (NH, 1, HD)
    wk3 = wk.reshape(E, M, NH, HD).transpose(2, 0, 1, 3).reshape(NH, E, M * HD)    # (NH, E, M*HD)
    bk3 = bk.reshape(1, M, NH, HD).transpose(2, 0, 1, 3).reshape(NH, 1, M * HD)
    wv3 = wv.reshape(E, M, NH, HD).transpose(2, 0, 1, 3).reshape(NH, E, M * HD)
    bv3 = bv.reshape(1, M, NH, HD).transpose(2, 0, 1, 3).reshape(NH, 1, M * HD)
    wo3 = wo.reshape(NH, HD, E)                                                    # (NH, HD, E)

    x_c = hidden_states.astype(cdt)

    # ---- kernel ----------------------------------------------------------------------
    def kernel(xq_ref, x_ref, mask_ref, wq_ref, bq_ref, wk_ref, bk_ref,
               wv_ref, bv_ref, wo_ref, bo_ref, out_ref, acc_ref):
        h = pl.program_id(2)

        @pl.when(h == 0)
        def _init():
            acc_ref[...] = jnp.zeros_like(acc_ref)

        xq = xq_ref[0]            # (TQ, E)  compute dtype
        x = x_ref[0]              # (T,  E)  compute dtype
        mask = mask_ref[0, 0]     # (TQ, T)  f32 additive mask

        # Per-head projections (scale already folded into wq/bq). f32 accumulation.
        q = (jnp.dot(xq, wq_ref[0], preferred_element_type=f32) + bq_ref[0]).astype(cdt)  # (TQ, HD)
        k = (jnp.dot(x, wk_ref[0], preferred_element_type=f32) + bk_ref[0]).astype(cdt)   # (T, M*HD)
        v = (jnp.dot(x, wv_ref[0], preferred_element_type=f32) + bv_ref[0]).astype(cdt)   # (T, M*HD)

        # Scores per multiplier group; joint softmax over the full M*T src axis,
        # without materializing a concatenated (TQ, M*T) matrix.
        dn_qkT = (((1,), (1,)), ((), ()))   # A @ B^T (contract last dims)
        scores = []
        for m in range(M):
            km = k[:, m * HD:(m + 1) * HD]                                      # (T, HD)
            s_m = lax.dot_general(q, km, dn_qkT, preferred_element_type=f32)    # (TQ, T)
            scores.append(s_m + mask)

        smax = scores[0].max(axis=-1, keepdims=True)
        for s_m in scores[1:]:
            smax = jnp.maximum(smax, s_m.max(axis=-1, keepdims=True))
        probs = [jnp.exp(s_m - smax) for s_m in scores]
        denom = probs[0].sum(axis=-1, keepdims=True)
        for p_m in probs[1:]:
            denom = denom + p_m.sum(axis=-1, keepdims=True)
        inv = pl.reciprocal(denom, approx=use_approx)                           # (TQ, 1)

        # PV accumulation in f32, single normalization at the end.
        o = jnp.dot(probs[0].astype(cdt), v[:, 0:HD], preferred_element_type=f32)
        for m in range(1, M):
            o = o + jnp.dot(probs[m].astype(cdt), v[:, m * HD:(m + 1) * HD],
                            preferred_element_type=f32)
        o = (o * inv).astype(cdt)                                               # (TQ, HD)

        # out_proj partial sum for this head, accumulated over the head grid axis.
        acc_ref[...] += jnp.dot(o, wo_ref[0], preferred_element_type=f32)       # (TQ, E)

        @pl.when(h == pl.num_programs(2) - 1)
        def _finalize():
            out_ref[0] = (acc_ref[...] + bo_ref[...]).astype(out_ref.dtype)

    # ---- pallas_call ----------------------------------------------------------------
    cp_kwargs = dict(dimension_semantics=("parallel", "parallel", "arbitrary"))
    if vmem_limit_bytes is not None:
        cp_kwargs["vmem_limit_bytes"] = vmem_limit_bytes

    return pl.pallas_call(
        kernel,
        out_shape=jax.ShapeDtypeStruct((B, T, E), hidden_states.dtype),
        grid=(B, NQ, NH),
        in_specs=[
            pl.BlockSpec((1, TQ, E), lambda b, qi, h: (b, qi, 0)),          # x (query tile)
            pl.BlockSpec((1, T, E), lambda b, qi, h: (b, 0, 0)),            # x (full, for K/V)
            pl.BlockSpec((1, 1, TQ, T), lambda b, qi, h: (b, 0, qi, 0)),    # additive mask tile
            pl.BlockSpec((1, E, HD), lambda b, qi, h: (h, 0, 0)),           # wq (per head)
            pl.BlockSpec((1, 1, HD), lambda b, qi, h: (h, 0, 0)),           # bq (per head)
            pl.BlockSpec((1, E, M * HD), lambda b, qi, h: (h, 0, 0)),       # wk (per head)
            pl.BlockSpec((1, 1, M * HD), lambda b, qi, h: (h, 0, 0)),       # bk (per head)
            pl.BlockSpec((1, E, M * HD), lambda b, qi, h: (h, 0, 0)),       # wv (per head)
            pl.BlockSpec((1, 1, M * HD), lambda b, qi, h: (h, 0, 0)),       # bv (per head)
            pl.BlockSpec((1, HD, E), lambda b, qi, h: (h, 0, 0)),           # wo (per head)
            pl.BlockSpec((1, E), lambda b, qi, h: (0, 0)),                  # bo
        ],
        out_specs=pl.BlockSpec((1, TQ, E), lambda b, qi, h: (b, qi, 0)),
        scratch_shapes=[pltpu.VMEM((TQ, E), jnp.float32)],
        compiler_params=pltpu.CompilerParams(**cp_kwargs),
    )(x_c, x_c, attn_mask.astype(f32),
      wq3.astype(cdt), bq3.astype(f32),
      wk3.astype(cdt), bk3.astype(f32),
      wv3.astype(cdt), bv3.astype(f32),
      wo3.astype(cdt), bo.astype(f32))


def clip_attention_mkv_ref(hidden_states, attn_mask, params, *, num_heads, multiplier):
    """Pure-JAX replica of the PyTorch forward (for correctness checking)."""
    B, T, E = hidden_states.shape
    NH, M = num_heads, multiplier
    HD = E // NH
    scale = HD ** (-0.5)
    wq, bq, wk, bk, wv, bv, wo, bo = params

    q = (hidden_states @ wq + bq[0]) * scale                    # (B, T, E)
    k = hidden_states @ wk + bk[0]                              # (B, T, E*M)
    v = hidden_states @ wv + bv[0]

    def shape_kv(t):  # (B, T, E*M) -> (B*NH, T*M, HD)
        return t.reshape(B, T * M, NH, HD).transpose(0, 2, 1, 3).reshape(B * NH, T * M, HD)

    q = q.reshape(B, T, NH, HD).transpose(0, 2, 1, 3).reshape(B * NH, T, HD)
    k = shape_kv(k)
    v = shape_kv(v)

    w = jnp.einsum('bqd,bkd->bqk', q, k)                        # (B*NH, T, T*M)
    w = w.reshape(B, NH, T, T, M) + attn_mask[:, :, :, :, None]
    w = w.reshape(B * NH, T, T * M)
    p = jax.nn.softmax(w, axis=-1)
    o = jnp.einsum('bqk,bkd->bqd', p, v)                        # (B*NH, T, HD)
    o = o.reshape(B, NH, T, HD).transpose(0, 2, 1, 3).reshape(B, T, E)
    return o @ wo + bo[0]


if __name__ == "__main__":
    # Small config: hidden_size=32, num_attention_heads=4, multiplier=2, seq=8, batch=2.
    B, T, E = 2, 8, 32
    NH, M = 4, 2
    HD = E // NH

    key = jax.random.PRNGKey(0)
    ks = jax.random.split(key, 10)

    x = jax.random.normal(ks[0], (B, T, E), jnp.float32)

    # Deterministic parameter init (PyTorch Linear weight is (out,in); we store (in,out)).
    wq = 0.05 * jax.random.normal(ks[1], (E, E), jnp.float32)
    bq = 0.01 * jax.random.normal(ks[2], (1, E), jnp.float32)
    wk = 0.05 * jax.random.normal(ks[3], (E, E * M), jnp.float32)
    bk = 0.01 * jax.random.normal(ks[4], (1, E * M), jnp.float32)
    wv = 0.05 * jax.random.normal(ks[5], (E, E * M), jnp.float32)
    bv = 0.01 * jax.random.normal(ks[6], (1, E * M), jnp.float32)
    wo = 0.05 * jax.random.normal(ks[7], (E, E), jnp.float32)
    bo = 0.01 * jax.random.normal(ks[8], (1, E), jnp.float32)
    params = (wq, bq, wk, bk, wv, bv, wo, bo)

    # Causal additive mask of shape (B, 1, T, src_len0=T), broadcast over multiplier.
    causal = jnp.where(jnp.tril(jnp.ones((T, T), jnp.bool_)), 0.0, -1e9).astype(jnp.float32)
    attn_mask = jnp.broadcast_to(causal[None, None], (B, 1, T, T))

    ref = clip_attention_mkv_ref(x, attn_mask, params, num_heads=NH, multiplier=M)

    # Exact-math mode (f32 MXU operands) -> tight check against the pure-JAX reference.
    run_f32 = jax.jit(functools.partial(clip_attention_mkv_pallas, num_heads=NH,
                                        multiplier=M, compute_dtype=jnp.float32))
    out_f32 = jax.block_until_ready(run_f32(x, attn_mask, params))
    assert out_f32.shape == (B, T, E)
    assert jnp.allclose(out_f32, ref, atol=1e-4, rtol=1e-4), "f32 kernel mismatch vs reference"

    # Default fast mode (bf16 MXU operands, f32 accumulation) -> bf16-level tolerance.
    run_bf16 = jax.jit(functools.partial(clip_attention_mkv_pallas, num_heads=NH,
                                         multiplier=M, compute_dtype=jnp.bfloat16))
    out_bf16 = jax.block_until_ready(run_bf16(x, attn_mask, params))
    assert out_bf16.shape == (B, T, E)
    assert jnp.allclose(out_bf16, ref, atol=2e-2, rtol=2e-2), "bf16 kernel mismatch vs reference"

    print("KERNEL_OK")
</pallas_src>

<mosaic_0001>
module attributes {stable_mosaic.version = 11 : i64} {
  func.func @kernel(%arg0: i32, %arg1: i32, %arg2: i32, %arg3: memref<1x8x32xf32, #tpu.memory_space<vmem>>, %arg4: memref<1x8x32xf32, #tpu.memory_space<vmem>>, %arg5: memref<1x1x8x8xf32, #tpu.memory_space<vmem>>, %arg6: memref<1x32x8xf32, #tpu.memory_space<vmem>>, %arg7: memref<1x1x8xf32, #tpu.memory_space<vmem>>, %arg8: memref<1x32x16xf32, #tpu.memory_space<vmem>>, %arg9: memref<1x1x16xf32, #tpu.memory_space<vmem>>, %arg10: memref<1x32x16xf32, #tpu.memory_space<vmem>>, %arg11: memref<1x1x16xf32, #tpu.memory_space<vmem>>, %arg12: memref<1x8x32xf32, #tpu.memory_space<vmem>>, %arg13: memref<1x32xf32, #tpu.memory_space<vmem>>, %arg14: memref<1x8x32xf32, #tpu.memory_space<vmem>>, %arg15: memref<8x32xf32, #tpu.memory_space<vmem>>) attributes {dimension_semantics = [#tpu.dimension_semantics<parallel>, #tpu.dimension_semantics<parallel>, #tpu.dimension_semantics<arbitrary>], iteration_bounds = array<i64: 2, 1, 4>, scalar_prefetch = 0 : i64, scratch_operands = 1 : i64, tpu.core_type = #tpu.core_type<tc>, window_params = [{transform_indices = @transform_0, window_bounds = array<i64: 1, 8, 32>}, {transform_indices = @transform_1, window_bounds = array<i64: 1, 8, 32>}, {transform_indices = @transform_2, window_bounds = array<i64: 1, 1, 8, 8>}, {transform_indices = @transform_3, window_bounds = array<i64: 1, 32, 8>}, {transform_indices = @transform_4, window_bounds = array<i64: 1, 1, 8>}, {transform_indices = @transform_5, window_bounds = array<i64: 1, 32, 16>}, {transform_indices = @transform_6, window_bounds = array<i64: 1, 1, 16>}, {transform_indices = @transform_7, window_bounds = array<i64: 1, 32, 16>}, {transform_indices = @transform_8, window_bounds = array<i64: 1, 1, 16>}, {transform_indices = @transform_9, window_bounds = array<i64: 1, 8, 32>}, {pipeline_mode = #tpu.pipeline_mode<synchronous>, transform_indices = @transform_10, window_bounds = array<i64: 1, 32>}, {transform_indices = @transform_11, window_bounds = array<i64: 1, 8, 32>}]} {
    %c0_i32 = arith.constant 0 : i32
    %0 = arith.cmpi eq, %arg2, %c0_i32 : i32
    %1 = arith.extui %0 : i1 to i32
    %c0_i32_0 = arith.constant 0 : i32
    %2 = arith.cmpi ne, %1, %c0_i32_0 : i32
    scf.if %2 {
      %cst_47 = arith.constant 0.000000e+00 : f32
      %69 = vector.broadcast %cst_47 : f32 to vector<8x32xf32>
      %c0_48 = arith.constant 0 : index
      %c0_49 = arith.constant 0 : index
      %70 = vector.load %arg15[%c0_48, %c0_49] : memref<8x32xf32, #tpu.memory_space<vmem>>, vector<8x32xf32>
      tpu.vector_store %arg15[%c0_48, %c0_49], %69 {strides = array<i32>} : memref<8x32xf32, #tpu.memory_space<vmem>>, vector<8x32xf32>,
    } else {
    }
    %c0 = arith.constant 0 : index
    %c0_1 = arith.constant 0 : index
    %c0_2 = arith.constant 0 : index
    %3 = vector.load %arg3[%c0, %c0_1, %c0_2] : memref<1x8x32xf32, #tpu.memory_space<vmem>>, vector<1x8x32xf32>
    %4 = vector.shape_cast %3 : vector<1x8x32xf32> to vector<8x32xf32>
    %c0_3 = arith.constant 0 : index
    %c0_4 = arith.constant 0 : index
    %c0_5 = arith.constant 0 : index
    %5 = vector.load %arg4[%c0_3, %c0_4, %c0_5] : memref<1x8x32xf32, #tpu.memory_space<vmem>>, vector<1x8x32xf32>
    %6 = vector.shape_cast %5 : vector<1x8x32xf32> to vector<8x32xf32>
    %c0_6 = arith.constant 0 : index
    %c0_7 = arith.constant 0 : index
    %c0_8 = arith.constant 0 : index
    %c0_9 = arith.constant 0 : index
    %7 = vector.load %arg5[%c0_6, %c0_7, %c0_8, %c0_9] : memref<1x1x8x8xf32, #tpu.memory_space<vmem>>, vector<1x1x8x8xf32>
    %8 = vector.shape_cast %7 : vector<1x1x8x8xf32> to vector<8x8xf32>
    %c0_10 = arith.constant 0 : index
    %c0_11 = arith.constant 0 : index
    %c0_12 = arith.constant 0 : index
    %9 = vector.load %arg6[%c0_10, %c0_11, %c0_12] : memref<1x32x8xf32, #tpu.memory_space<vmem>>, vector<1x32x8xf32>
    %10 = vector.shape_cast %9 : vector<1x32x8xf32> to vector<32x8xf32>
    %cst = arith.constant dense<0.000000e+00> : vector<8x8xf32>
    %11 = tpu.matmul %4, %10, %cst {dimension_numbers = #tpu.dot_dimension_numbers<[1], [0], [0], [1], [0, 0, 1, 1], [], []>} : vector<8x32xf32>, vector<32x8xf32>, vector<8x8xf32> -> vector<8x8xf32>
    %c0_13 = arith.constant 0 : index
    %c0_14 = arith.constant 0 : index
    %c0_15 = arith.constant 0 : index
    %12 = vector.load %arg7[%c0_13, %c0_14, %c0_15] : memref<1x1x8xf32, #tpu.memory_space<vmem>>, vector<1x1x8xf32>
    %13 = vector.shape_cast %12 : vector<1x1x8xf32> to vector<1x8xf32>
    %14 = vector.broadcast %13 : vector<1x8xf32> to vector<8x8xf32>
    %15 = arith.addf %11, %14 : vector<8x8xf32>
    %c0_16 = arith.constant 0 : index
    %c0_17 = arith.constant 0 : index
    %c0_18 = arith.constant 0 : index
    %16 = vector.load %arg8[%c0_16, %c0_17, %c0_18] : memref<1x32x16xf32, #tpu.memory_space<vmem>>, vector<1x32x16xf32>
    %17 = vector.shape_cast %16 : vector<1x32x16xf32> to vector<32x16xf32>
    %cst_19 = arith.constant dense<0.000000e+00> : vector<8x16xf32>
    %18 = tpu.matmul %6, %17, %cst_19 {dimension_numbers = #tpu.dot_dimension_numbers<[1], [0], [0], [1], [0, 0, 1, 1], [], []>} : vector<8x32xf32>, vector<32x16xf32>, vector<8x16xf32> -> vector<8x16xf32>
    %c0_20 = arith.constant 0 : index
    %c0_21 = arith.constant 0 : index
    %c0_22 = arith.constant 0 : index
    %19 = vector.load %arg9[%c0_20, %c0_21, %c0_22] : memref<1x1x16xf32, #tpu.memory_space<vmem>>, vector<1x1x16xf32>
    %20 = vector.shape_cast %19 : vector<1x1x16xf32> to vector<1x16xf32>
    %21 = vector.broadcast %20 : vector<1x16xf32> to vector<8x16xf32>
    %22 = arith.addf %18, %21 : vector<8x16xf32>
    %c0_23 = arith.constant 0 : index
    %c0_24 = arith.constant 0 : index
    %c0_25 = arith.constant 0 : index
    %23 = vector.load %arg10[%c0_23, %c0_24, %c0_25] : memref<1x32x16xf32, #tpu.memory_space<vmem>>, vector<1x32x16xf32>
    %24 = vector.shape_cast %23 : vector<1x32x16xf32> to vector<32x16xf32>
    %cst_26 = arith.constant dense<0.000000e+00> : vector<8x16xf32>
    %25 = tpu.matmul %6, %24, %cst_26 {dimension_numbers = #tpu.dot_dimension_numbers<[1], [0], [0], [1], [0, 0, 1, 1], [], []>} : vector<8x32xf32>, vector<32x16xf32>, vector<8x16xf32> -> vector<8x16xf32>
    %c0_27 = arith.constant 0 : index
    %c0_28 = arith.constant 0 : index
    %c0_29 = arith.constant 0 : index
    %26 = vector.load %arg11[%c0_27, %c0_28, %c0_29] : memref<1x1x16xf32, #tpu.memory_space<vmem>>, vector<1x1x16xf32>
    %27 = vector.shape_cast %26 : vector<1x1x16xf32> to vector<1x16xf32>
    %28 = vector.broadcast %27 : vector<1x16xf32> to vector<8x16xf32>
    %29 = arith.addf %25, %28 : vector<8x16xf32>
    %30 = vector.extract_strided_slice %22 {offsets = [0, 0], sizes = [8, 8], strides = [1, 1]} : vector<8x16xf32> to vector<8x8xf32>
    %cst_30 = arith.constant dense<0.000000e+00> : vector<8x8xf32>
    %31 = tpu.matmul %15, %30, %cst_30 {dimension_numbers = #tpu.dot_dimension_numbers<[1], [1], [0], [0], [0, 0, 1, 0], [], []>} : vector<8x8xf32>, vector<8x8xf32>, vector<8x8xf32> -> vector<8x8xf32>
    %32 = arith.addf %31, %8 : vector<8x8xf32>
    %33 = vector.extract_strided_slice %22 {offsets = [0, 8], sizes = [8, 8], strides = [1, 1]} : vector<8x16xf32> to vector<8x8xf32>
    %cst_31 = arith.constant dense<0.000000e+00> : vector<8x8xf32>
    %34 = tpu.matmul %15, %33, %cst_31 {dimension_numbers = #tpu.dot_dimension_numbers<[1], [1], [0], [0], [0, 0, 1, 0], [], []>} : vector<8x8xf32>, vector<8x8xf32>, vector<8x8xf32> -> vector<8x8xf32>
    %35 = arith.addf %34, %8 : vector<8x8xf32>
    %cst_32 = arith.constant dense<0xFF800000> : vector<8xf32>
    %36 = vector.multi_reduction <maximumf>, %32, %cst_32 [1] : vector<8x8xf32> to vector<8xf32>
    %37 = vector.shape_cast %36 : vector<8xf32> to vector<8x1xf32>
    %cst_33 = arith.constant dense<0xFF800000> : vector<8xf32>
    %38 = vector.multi_reduction <maximumf>, %35, %cst_33 [1] : vector<8x8xf32> to vector<8xf32>
    %39 = vector.shape_cast %38 : vector<8xf32> to vector<8x1xf32>
    %40 = arith.maximumf %37, %39 : vector<8x1xf32>
    %41 = vector.broadcast %40 : vector<8x1xf32> to vector<8x8xf32>
    %42 = arith.subf %32, %41 : vector<8x8xf32>
    %43 = math.exp %42 : vector<8x8xf32>
    %44 = vector.broadcast %40 : vector<8x1xf32> to vector<8x8xf32>
    %45 = arith.subf %35, %44 : vector<8x8xf32>
    %46 = math.exp %45 : vector<8x8xf32>
    %cst_34 = arith.constant dense<0.000000e+00> : vector<8xf32>
    %47 = vector.multi_reduction <add>, %43, %cst_34 [1] : vector<8x8xf32> to vector<8xf32>
    %48 = vector.shape_cast %47 : vector<8xf32> to vector<8x1xf32>
    %cst_35 = arith.constant dense<0.000000e+00> : vector<8xf32>
    %49 = vector.multi_reduction <add>, %46, %cst_35 [1] : vector<8x8xf32> to vector<8xf32>
    %50 = vector.shape_cast %49 : vector<8xf32> to vector<8x1xf32>
    %51 = arith.addf %48, %50 : vector<8x1xf32>
    %52 = tpu.reciprocal %51 : vector<8x1xf32> -> vector<8x1xf32>
    %53 = vector.extract_strided_slice %29 {offsets = [0, 0], sizes = [8, 8], strides = [1, 1]} : vector<8x16xf32> to vector<8x8xf32>
    %cst_36 = arith.constant dense<0.000000e+00> : vector<8x8xf32>
    %54 = tpu.matmul %43, %53, %cst_36 {dimension_numbers = #tpu.dot_dimension_numbers<[1], [0], [0], [1], [0, 0, 1, 1], [], []>} : vector<8x8xf32>, vector<8x8xf32>, vector<8x8xf32> -> vector<8x8xf32>
    %55 = vector.extract_strided_slice %29 {offsets = [0, 8], sizes = [8, 8], strides = [1, 1]} : vector<8x16xf32> to vector<8x8xf32>
    %cst_37 = arith.constant dense<0.000000e+00> : vector<8x8xf32>
    %56 = tpu.matmul %46, %55, %cst_37 {dimension_numbers = #tpu.dot_dimension_numbers<[1], [0], [0], [1], [0, 0, 1, 1], [], []>} : vector<8x8xf32>, vector<8x8xf32>, vector<8x8xf32> -> vector<8x8xf32>
    %57 = arith.addf %54, %56 : vector<8x8xf32>
    %58 = vector.broadcast %52 : vector<8x1xf32> to vector<8x8xf32>
    %59 = arith.mulf %57, %58 : vector<8x8xf32>
    %c0_38 = arith.constant 0 : index
    %c0_39 = arith.constant 0 : index
    %60 = vector.load %arg15[%c0_38, %c0_39] : memref<8x32xf32, #tpu.memory_space<vmem>>, vector<8x32xf32>
    %c0_40 = arith.constant 0 : index
    %c0_41 = arith.constant 0 : index
    %c0_42 = arith.constant 0 : index
    %61 = vector.load %arg12[%c0_40, %c0_41, %c0_42] : memref<1x8x32xf32, #tpu.memory_space<vmem>>, vector<1x8x32xf32>
    %62 = vector.shape_cast %61 : vector<1x8x32xf32> to vector<8x32xf32>
    %cst_43 = arith.constant dense<0.000000e+00> : vector<8x32xf32>
    %63 = tpu.matmul %59, %62, %cst_43 {dimension_numbers = #tpu.dot_dimension_numbers<[1], [0], [0], [1], [0, 0, 1, 1], [], []>} : vector<8x8xf32>, vector<8x32xf32>, vector<8x32xf32> -> vector<8x32xf32>
    %64 = arith.addf %60, %63 : vector<8x32xf32>
    %c0_44 = arith.constant 0 : index
    %c0_45 = arith.constant 0 : index
    %65 = vector.load %arg15[%c0_44, %c0_45] : memref<8x32xf32, #tpu.memory_space<vmem>>, vector<8x32xf32>
    tpu.vector_store %arg15[%c0_44, %c0_45], %64 {strides = array<i32>} : memref<8x32xf32, #tpu.memory_space<vmem>>, vector<8x32xf32>,
    %c3_i32 = arith.constant 3 : i32
    %66 = arith.cmpi eq, %arg2, %c3_i32 : i32
    %67 = arith.extui %66 : i1 to i32
    %c0_i32_46 = arith.constant 0 : i32
    %68 = arith.cmpi ne, %67, %c0_i32_46 : i32
    scf.if %68 {
      %c0_47 = arith.constant 0 : index
      %c0_48 = arith.constant 0 : index
      %69 = vector.load %arg15[%c0_47, %c0_48] : memref<8x32xf32, #tpu.memory_space<vmem>>, vector<8x32xf32>
      %c0_49 = arith.constant 0 : index
      %c0_50 = arith.constant 0 : index
      %70 = vector.load %arg13[%c0_49, %c0_50] : memref<1x32xf32, #tpu.memory_space<vmem>>, vector<1x32xf32>
      %71 = vector.broadcast %70 : vector<1x32xf32> to vector<8x32xf32>
      %72 = arith.addf %69, %71 : vector<8x32xf32>
      %c0_51 = arith.constant 0 : index
      %c0_52 = arith.constant 0 : index
      %c0_53 = arith.constant 0 : index
      %73 = vector.load %arg14[%c0_51, %c0_52, %c0_53] : memref<1x8x32xf32, #tpu.memory_space<vmem>>, vector<1x8x32xf32>
      %74 = vector.shape_cast %73 : vector<1x8x32xf32> to vector<8x32xf32>
      %75 = vector.shape_cast %72 : vector<8x32xf32> to vector<1x8x32xf32>
      tpu.vector_store %arg14[%c0_51, %c0_52, %c0_53], %75 {strides = array<i32>} : memref<1x8x32xf32, #tpu.memory_space<vmem>>, vector<1x8x32xf32>,
    } else {
    }
    return
  }
  func.func @transform_0(%arg0: i32, %arg1: i32, %arg2: i32) -> (i32, i32, i32) {
    %c0_i32 = arith.constant 0 : i32
    %c0_i32_0 = arith.constant 0 : i32
    return %arg0, %arg1, %c0_i32 : i32, i32, i32
  }
  func.func @transform_1(%arg0: i32, %arg1: i32, %arg2: i32) -> (i32, i32, i32) {
    %c0_i32 = arith.constant 0 : i32
    %c0_i32_0 = arith.constant 0 : i32
    %c0_i32_1 = arith.constant 0 : i32
    return %arg0, %c0_i32, %c0_i32_0 : i32, i32, i32
  }
  func.func @transform_2(%arg0: i32, %arg1: i32, %arg2: i32) -> (i32, i32, i32, i32) {
    %c0_i32 = arith.constant 0 : i32
    %c0_i32_0 = arith.constant 0 : i32
    %c0_i32_1 = arith.constant 0 : i32
    return %arg0, %c0_i32, %arg1, %c0_i32_0 : i32, i32, i32, i32
  }
  func.func @transform_3(%arg0: i32, %arg1: i32, %arg2: i32) -> (i32, i32, i32) {
    %c0_i32 = arith.constant 0 : i32
    %c0_i32_0 = arith.constant 0 : i32
    %c0_i32_1 = arith.constant 0 : i32
    return %arg2, %c0_i32, %c0_i32_0 : i32, i32, i32
  }
  func.func @transform_4(%arg0: i32, %arg1: i32, %arg2: i32) -> (i32, i32, i32) {
    %c0_i32 = arith.constant 0 : i32
    %c0_i32_0 = arith.constant 0 : i32
    %c0_i32_1 = arith.constant 0 : i32
    return %arg2, %c0_i32, %c0_i32_0 : i32, i32, i32
  }
  func.func @transform_5(%arg0: i32, %arg1: i32, %arg2: i32) -> (i32, i32, i32) {
    %c0_i32 = arith.constant 0 : i32
    %c0_i32_0 = arith.constant 0 : i32
    %c0_i32_1 = arith.constant 0 : i32
    return %arg2, %c0_i32, %c0_i32_0 : i32, i32, i32
  }
  func.func @transform_6(%arg0: i32, %arg1: i32, %arg2: i32) -> (i32, i32, i32) {
    %c0_i32 = arith.constant 0 : i32
    %c0_i32_0 = arith.constant 0 : i32
    %c0_i32_1 = arith.constant 0 : i32
    return %arg2, %c0_i32, %c0_i32_0 : i32, i32, i32
  }
  func.func @transform_7(%arg0: i32, %arg1: i32, %arg2: i32) -> (i32, i32, i32) {
    %c0_i32 = arith.constant 0 : i32
    %c0_i32_0 = arith.constant 0 : i32
    %c0_i32_1 = arith.constant 0 : i32
    return %arg2, %c0_i32, %c0_i32_0 : i32, i32, i32
  }
  func.func @transform_8(%arg0: i32, %arg1: i32, %arg2: i32) -> (i32, i32, i32) {
    %c0_i32 = arith.constant 0 : i32
    %c0_i32_0 = arith.constant 0 : i32
    %c0_i32_1 = arith.constant 0 : i32
    return %arg2, %c0_i32, %c0_i32_0 : i32, i32, i32
  }
  func.func @transform_9(%arg0: i32, %arg1: i32, %arg2: i32) -> (i32, i32, i32) {
    %c0_i32 = arith.constant 0 : i32
    %c0_i32_0 = arith.constant 0 : i32
    %c0_i32_1 = arith.constant 0 : i32
    return %arg2, %c0_i32, %c0_i32_0 : i32, i32, i32
  }
  func.func @transform_10(%arg0: i32, %arg1: i32, %arg2: i32) -> (i32, i32) {
    %c0_i32 = arith.constant 0 : i32
    %c0_i32_0 = arith.constant 0 : i32
    %c0_i32_1 = arith.constant 0 : i32
    return %c0_i32, %c0_i32_0 : i32, i32
  }
  func.func @transform_11(%arg0: i32, %arg1: i32, %arg2: i32) -> (i32, i32, i32) {
    %c0_i32 = arith.constant 0 : i32
    %c0_i32_0 = arith.constant 0 : i32
    return %arg0, %arg1, %c0_i32 : i32, i32, i32
  }
}

</mosaic_0001>

<llo_original>
// kernel: clip_attention_mkv_pallas.1
$region0: #{clip_attention_mkv_pallas.1}
  #allocation0 [shape = 'u32[]', space=smem, size = 0x4, offset = 0x4, fixed_abs, tag = 'smem constant byte address 0x4 - core index']
  #allocation1 [shape = 'u32[144,128]{1,0:T(1,128)}', space=vmem, size = 0x12000, scoped, tag = 'internal scratch']
  #allocation2 [shape = 'f32[8,32]{1,0:T(8,128)}', space=vmem, size = 0x1000, scoped, tag = 'scratch operand']
  %s0 = inlined_call_operand.vmem [shape: f32[2,8,32], index: 0, kind: input, shape index: {}, may-alias: {0,1}]
  %s1 = inlined_call_operand.vmem [shape: f32[2,8,32], index: 1, kind: input, shape index: {}, may-alias: {0,1}]
  %s2 = inlined_call_operand.vmem [shape: f32[2,1,8,8], index: 2, kind: input, shape index: {}]
  %s3 = inlined_call_operand.vmem [shape: f32[4,32,8], index: 3, kind: input, shape index: {}]
  %s4 = inlined_call_operand.vmem [shape: f32[4,1,8], index: 4, kind: input, shape index: {}]
  %s5 = inlined_call_operand.vmem [shape: f32[4,32,16], index: 5, kind: input, shape index: {}]
  %s6 = inlined_call_operand.vmem [shape: f32[4,1,16], index: 6, kind: input, shape index: {}]
  %s7 = inlined_call_operand.vmem [shape: f32[4,32,16], index: 7, kind: input, shape index: {}]
  %s8 = inlined_call_operand.vmem [shape: f32[4,1,16], index: 8, kind: input, shape index: {}]
  %s9 = inlined_call_operand.vmem [shape: f32[4,8,32], index: 9, kind: input, shape index: {}]
  %s10 = inlined_call_operand.vmem [shape: f32[1,32], index: 10, kind: input, shape index: {}]
  %s11 = inlined_call_operand.hbm [shape: f32[2,8,32], index: 11, kind: output, shape index: {}]
  %s12 = sld [smem:[#allocation0]]
  $region85: #{clip_attention_mkv_pallas.1} parent=0
    _
  %s14 = ssub.s32 1, %s12
  %s15 = scalar_select 0, %s14, %s12
  $region1: #{clip_attention_mkv_pallas.1} parent=0
    #allocation3 [shape = 'u8[8192]{0}', space=vmem, size = 0x2000, scoped, tag = 'output window, operand 0']
    #allocation4 [shape = 's32[2]{0}', space=sflag, size = 0x8, scoped, tag = 'scoped memory for clip_attention_mkv_pallas.1']
    %16 = vsyncpa [#allocation4], 0
    %s17 = scalar_lea.sflag [#allocation4], 1
    %18 = vsyncpa %s17, 0
    loop: start=0, step=1, limit=10
    $region2: #{clip_attention_mkv_pallas.1} parent=1 // loop_pre_header
      _
    $region3: #{clip_attention_mkv_pallas.1} parent=1 // loop_header
      %s20 = sphi 0, %s24
      %p21 = scmp.ge.s32.totalorder %s20, 10
      %s27 = sphi 0, %s46
      %s28 = sphi 0, %s42
      %s29 = sphi 0, %s38
      %s30 = sphi 0, %s27
      %s31 = sphi 0, %s28
      %s32 = sphi 0, %s29
      %s33 = sphi 0, %s30
      %s34 = sphi 0, %s31
      %s35 = sphi 0, %s32
      %s51 = sphi 0, %s53
      %s54 = sphi 0, %s51
      %s55 = sphi 0, %s54
      %s71 = sphi 0, %s55
      %s77 = sphi 0, %s79
      %s80 = sphi 0, %s77
      %s81 = sphi 0, %s80
      %s97 = sphi 0, %s81
      %s105 = sphi 0, %s107
      %s108 = sphi 0, %s105
      %s109 = sphi 0, %s108
      %s125 = sphi 0, %s109
      %s131 = sphi 0, %s133
      %s134 = sphi 0, %s131
      %s135 = sphi 0, %s134
      %s151 = sphi 0, %s135
      %s157 = sphi 0, %s159
      %s160 = sphi 0, %s157
      %s161 = sphi 0, %s160
      %s177 = sphi 0, %s161
      %s183 = sphi 0, %s185
      %s186 = sphi 0, %s183
      %s187 = sphi 0, %s186
      %s203 = sphi 0, %s187
      %s209 = sphi 0, %s211
      %s212 = sphi 0, %s209
      %s213 = sphi 0, %s212
      %s229 = sphi 0, %s213
      %s235 = sphi 0, %s237
      %s238 = sphi 0, %s235
      %s239 = sphi 0, %s238
      %s255 = sphi 0, %s239
      %s261 = sphi 0, %s263
      %s264 = sphi 0, %s261
      %s265 = sphi 0, %s264
      %s281 = sphi 0, %s265
      %s287 = sphi 0, %s289
      %s290 = sphi 0, %s287
      %s291 = sphi 0, %s290
      %s307 = sphi 0, %s291
      %s311 = sphi 0, %s311
      %s313 = sphi 0, %s311
      %s314 = sphi 0, %s313
      %s328 = sphi 0, %s314
      %s336 = sphi 0, %s338
      %s339 = sphi 0, %s336
      %s340 = sphi 0, %s339
      %s356 = sphi 0, %s340
    $region4: #{clip_attention_mkv_pallas.1} parent=1 // loop_header_branch
      %23 = sbr.rel (%p21) target = $region8
    $region5: #{clip_attention_mkv_pallas.1} parent=1 // loop_body
      %s25 = ssub.s32 %s20, 1
      %s26 = ssub.s32 %s20, 2
      %s36 = sadd.s32 1, %s29
      %p37 = scmp.ge.s32.totalorder %s36, 4
      %s38 = scalar_select %p37, 0, %s36
      %s39 = sadd.s32 1, %s28
      %s40 = scalar_select %p37, %s39, %s28
      %p41 = scmp.ge.s32.totalorder %s40, 1
      %s42 = scalar_select %p41, 0, %s40
      %s43 = sadd.s32 1, %s27
      %s44 = scalar_select %p41, %s43, %s27
      %p45 = scmp.ge.s32.totalorder %s44, 2
      %s46 = scalar_select %p45, 0, %s44
      %s47 = ssub.s32 %s27, %s46
      %s48 = ssub.s32 %s28, %s42
      %s49 = sor.u32 %s47, %s48
      %p50 = scmp.eq.s32.totalorder %s49, 0
      %s52 = sadd.s32 %s51, 1
      %s53 = scalar_select %p50, %s51, %s52
      %p56 = pneg %p50
      %p57 = scmp.eq.s32.totalorder %s20, 7
      %p58 = por %p56, %p57
      %p59 = scmp.ne.s32.totalorder %s51, %s54
      %p60 = scmp.eq.s32.totalorder %s20, 0
      %p61 = por %p59, %p60
      %p62 = scmp.ne.s32.totalorder %s51, %s54
      %p63 = scmp.eq.s32.totalorder %s25, 7
      %p64 = por %p62, %p63
      %p65 = scmp.ne.s32.totalorder %s54, %s55
      %p66 = scmp.eq.s32.totalorder %s25, 0
      %p67 = por %p65, %p66
      %p68 = scmp.ne.s32.totalorder %s54, %s55
      %p69 = scmp.eq.s32.totalorder %s26, 7
      %p70 = por %p68, %p69
      %p72 = scmp.ne.s32.totalorder %s55, %s71
      %p73 = scmp.eq.s32.totalorder %s26, 0
      %p74 = por %p72, %p73
      %s75 = ssub.s32 %s27, %s46
      %p76 = scmp.eq.s32.totalorder %s75, 0
      %s78 = sadd.s32 %s77, 1
      %s79 = scalar_select %p76, %s77, %s78
      %p82 = pneg %p76
      %p83 = scmp.eq.s32.totalorder %s20, 7
      %p84 = por %p82, %p83
      %p85 = scmp.ne.s32.totalorder %s77, %s80
      %p86 = scmp.eq.s32.totalorder %s20, 0
      %p87 = por %p85, %p86
      %p88 = scmp.ne.s32.totalorder %s77, %s80
      %p89 = scmp.eq.s32.totalorder %s25, 7
      %p90 = por %p88, %p89
      %p91 = scmp.ne.s32.totalorder %s80, %s81
      %p92 = scmp.eq.s32.totalorder %s25, 0
      %p93 = por %p91, %p92
      %p94 = scmp.ne.s32.totalorder %s80, %s81
      %p95 = scmp.eq.s32.totalorder %s26, 7
      %p96 = por %p94, %p95
      %p98 = scmp.ne.s32.totalorder %s81, %s97
      %p99 = scmp.eq.s32.totalorder %s26, 0
      %p100 = por %p98, %p99
      %s101 = ssub.s32 %s27, %s46
      %s102 = ssub.s32 %s28, %s42
      %s103 = sor.u32 %s101, %s102
      %p104 = scmp.eq.s32.totalorder %s103, 0
      %s106 = sadd.s32 %s105, 1
      %s107 = scalar_select %p104, %s105, %s106
      %p110 = pneg %p104
      %p111 = scmp.eq.s32.totalorder %s20, 7
      %p112 = por %p110, %p111
      %p113 = scmp.ne.s32.totalorder %s105, %s108
      %p114 = scmp.eq.s32.totalorder %s20, 0
      %p115 = por %p113, %p114
      %p116 = scmp.ne.s32.totalorder %s105, %s108
      %p117 = scmp.eq.s32.totalorder %s25, 7
      %p118 = por %p116, %p117
      %p119 = scmp.ne.s32.totalorder %s108, %s109
      %p120 = scmp.eq.s32.totalorder %s25, 0
      %p121 = por %p119, %p120
      %p122 = scmp.ne.s32.totalorder %s108, %s109
      %p123 = scmp.eq.s32.totalorder %s26, 7
      %p124 = por %p122, %p123
      %p126 = scmp.ne.s32.totalorder %s109, %s125
      %p127 = scmp.eq.s32.totalorder %s26, 0
      %p128 = por %p126, %p127
      %s129 = ssub.s32 %s29, %s38
      %p130 = scmp.eq.s32.totalorder %s129, 0
      %s132 = sadd.s32 %s131, 1
      %s133 = scalar_select %p130, %s131, %s132
      %p136 = pneg %p130
      %p137 = scmp.eq.s32.totalorder %s20, 7
      %p138 = por %p136, %p137
      %p139 = scmp.ne.s32.totalorder %s131, %s134
      %p140 = scmp.eq.s32.totalorder %s20, 0
      %p141 = por %p139, %p140
      %p142 = scmp.ne.s32.totalorder %s131, %s134
      %p143 = scmp.eq.s32.totalorder %s25, 7
      %p144 = por %p142, %p143
      %p145 = scmp.ne.s32.totalorder %s134, %s135
      %p146 = scmp.eq.s32.totalorder %s25, 0
      %p147 = por %p145, %p146
      %p148 = scmp.ne.s32.totalorder %s134, %s135
      %p149 = scmp.eq.s32.totalorder %s26, 7
      %p150 = por %p148, %p149
      %p152 = scmp.ne.s32.totalorder %s135, %s151
      %p153 = scmp.eq.s32.totalorder %s26, 0
      %p154 = por %p152, %p153
      %s155 = ssub.s32 %s29, %s38
      %p156 = scmp.eq.s32.totalorder %s155, 0
      %s158 = sadd.s32 %s157, 1
      %s159 = scalar_select %p156, %s157, %s158
      %p162 = pneg %p156
      %p163 = scmp.eq.s32.totalorder %s20, 7
      %p164 = por %p162, %p163
      %p165 = scmp.ne.s32.totalorder %s157, %s160
      %p166 = scmp.eq.s32.totalorder %s20, 0
      %p167 = por %p165, %p166
      %p168 = scmp.ne.s32.totalorder %s157, %s160
      %p169 = scmp.eq.s32.totalorder %s25, 7
      %p170 = por %p168, %p169
      %p171 = scmp.ne.s32.totalorder %s160, %s161
      %p172 = scmp.eq.s32.totalorder %s25, 0
      %p173 = por %p171, %p172
      %p174 = scmp.ne.s32.totalorder %s160, %s161
      %p175 = scmp.eq.s32.totalorder %s26, 7
      %p176 = por %p174, %p175
      %p178 = scmp.ne.s32.totalorder %s161, %s177
      %p179 = scmp.eq.s32.totalorder %s26, 0
      %p180 = por %p178, %p179
      %s181 = ssub.s32 %s29, %s38
      %p182 = scmp.eq.s32.totalorder %s181, 0
      %s184 = sadd.s32 %s183, 1
      %s185 = scalar_select %p182, %s183, %s184
      %p188 = pneg %p182
      %p189 = scmp.eq.s32.totalorder %s20, 7
      %p190 = por %p188, %p189
      %p191 = scmp.ne.s32.totalorder %s183, %s186
      %p192 = scmp.eq.s32.totalorder %s20, 0
      %p193 = por %p191, %p192
      %p194 = scmp.ne.s32.totalorder %s183, %s186
      %p195 = scmp.eq.s32.totalorder %s25, 7
      %p196 = por %p194, %p195
      %p197 = scmp.ne.s32.totalorder %s186, %s187
      %p198 = scmp.eq.s32.totalorder %s25, 0
      %p199 = por %p197, %p198
      %p200 = scmp.ne.s32.totalorder %s186, %s187
      %p201 = scmp.eq.s32.totalorder %s26, 7
      %p202 = por %p200, %p201
      %p204 = scmp.ne.s32.totalorder %s187, %s203
      %p205 = scmp.eq.s32.totalorder %s26, 0
      %p206 = por %p204, %p205
      %s207 = ssub.s32 %s29, %s38
      %p208 = scmp.eq.s32.totalorder %s207, 0
      %s210 = sadd.s32 %s209, 1
      %s211 = scalar_select %p208, %s209, %s210
      %p214 = pneg %p208
      %p215 = scmp.eq.s32.totalorder %s20, 7
      %p216 = por %p214, %p215
      %p217 = scmp.ne.s32.totalorder %s209, %s212
      %p218 = scmp.eq.s32.totalorder %s20, 0
      %p219 = por %p217, %p218
      %p220 = scmp.ne.s32.totalorder %s209, %s212
      %p221 = scmp.eq.s32.totalorder %s25, 7
      %p222 = por %p220, %p221
      %p223 = scmp.ne.s32.totalorder %s212, %s213
      %p224 = scmp.eq.s32.totalorder %s25, 0
      %p225 = por %p223, %p224
      %p226 = scmp.ne.s32.totalorder %s212, %s213
      %p227 = scmp.eq.s32.totalorder %s26, 7
      %p228 = por %p226, %p227
      %p230 = scmp.ne.s32.totalorder %s213, %s229
      %p231 = scmp.eq.s32.totalorder %s26, 0
      %p232 = por %p230, %p231
      %s233 = ssub.s32 %s29, %s38
      %p234 = scmp.eq.s32.totalorder %s233, 0
      %s236 = sadd.s32 %s235, 1
      %s237 = scalar_select %p234, %s235, %s236
      %p240 = pneg %p234
      %p241 = scmp.eq.s32.totalorder %s20, 7
      %p242 = por %p240, %p241
      %p243 = scmp.ne.s32.totalorder %s235, %s238
      %p244 = scmp.eq.s32.totalorder %s20, 0
      %p245 = por %p243, %p244
      %p246 = scmp.ne.s32.totalorder %s235, %s238
      %p247 = scmp.eq.s32.totalorder %s25, 7
      %p248 = por %p246, %p247
      %p249 = scmp.ne.s32.totalorder %s238, %s239
      %p250 = scmp.eq.s32.totalorder %s25, 0
      %p251 = por %p249, %p250
      %p252 = scmp.ne.s32.totalorder %s238, %s239
      %p253 = scmp.eq.s32.totalorder %s26, 7
      %p254 = por %p252, %p253
      %p256 = scmp.ne.s32.totalorder %s239, %s255
      %p257 = scmp.eq.s32.totalorder %s26, 0
      %p258 = por %p256, %p257
      %s259 = ssub.s32 %s29, %s38
      %p260 = scmp.eq.s32.totalorder %s259, 0
      %s262 = sadd.s32 %s261, 1
      %s263 = scalar_select %p260, %s261, %s262
      %p266 = pneg %p260
      %p267 = scmp.eq.s32.totalorder %s20, 7
      %p268 = por %p266, %p267
      %p269 = scmp.ne.s32.totalorder %s261, %s264
      %p270 = scmp.eq.s32.totalorder %s20, 0
      %p271 = por %p269, %p270
      %p272 = scmp.ne.s32.totalorder %s261, %s264
      %p273 = scmp.eq.s32.totalorder %s25, 7
      %p274 = por %p272, %p273
      %p275 = scmp.ne.s32.totalorder %s264, %s265
      %p276 = scmp.eq.s32.totalorder %s25, 0
      %p277 = por %p275, %p276
      %p278 = scmp.ne.s32.totalorder %s264, %s265
      %p279 = scmp.eq.s32.totalorder %s26, 7
      %p280 = por %p278, %p279
      %p282 = scmp.ne.s32.totalorder %s265, %s281
      %p283 = scmp.eq.s32.totalorder %s26, 0
      %p284 = por %p282, %p283
      %s285 = ssub.s32 %s29, %s38
      %p286 = scmp.eq.s32.totalorder %s285, 0
      %s288 = sadd.s32 %s287, 1
      %s289 = scalar_select %p286, %s287, %s288
      %p292 = pneg %p286
      %p293 = scmp.eq.s32.totalorder %s20, 7
      %p294 = por %p292, %p293
      %p295 = scmp.ne.s32.totalorder %s287, %s290
      %p296 = scmp.eq.s32.totalorder %s20, 0
      %p297 = por %p295, %p296
      %p298 = scmp.ne.s32.totalorder %s287, %s290
      %p299 = scmp.eq.s32.totalorder %s25, 7
      %p300 = por %p298, %p299
      %p301 = scmp.ne.s32.totalorder %s290, %s291
      %p302 = scmp.eq.s32.totalorder %s25, 0
      %p303 = por %p301, %p302
      %p304 = scmp.ne.s32.totalorder %s290, %s291
      %p305 = scmp.eq.s32.totalorder %s26, 7
      %p306 = por %p304, %p305
      %p308 = scmp.ne.s32.totalorder %s291, %s307
      %p309 = scmp.eq.s32.totalorder %s26, 0
      %p310 = por %p308, %p309
      %s312 = sadd.s32 %s311, 1
      %p315 = scmp.eq.s32.totalorder %s20, 7
      %p316 = scmp.ne.s32.totalorder %s311, %s313
      %p317 = scmp.eq.s32.totalorder %s20, 0
      %p318 = por %p316, %p317
      %p319 = scmp.ne.s32.totalorder %s311, %s313
      %p320 = scmp.eq.s32.totalorder %s25, 7
      %p321 = por %p319, %p320
      %p322 = scmp.ne.s32.totalorder %s313, %s314
      %p323 = scmp.eq.s32.totalorder %s25, 0
      %p324 = por %p322, %p323
      %p325 = scmp.ne.s32.totalorder %s313, %s314
      %p326 = scmp.eq.s32.totalorder %s26, 7
      %p327 = por %p325, %p326
      %p329 = scmp.ne.s32.totalorder %s314, %s328
      %p330 = scmp.eq.s32.totalorder %s26, 0
      %p331 = por %p329, %p330
      %s332 = ssub.s32 %s27, %s46
      %s333 = ssub.s32 %s28, %s42
      %s334 = sor.u32 %s332, %s333
      %p335 = scmp.eq.s32.totalorder %s334, 0
      %s337 = sadd.s32 %s336, 1
      %s338 = scalar_select %p335, %s336, %s337
      %p341 = pneg %p335
      %p342 = scmp.eq.s32.totalorder %s20, 7
      %p343 = por %p341, %p342
      %p344 = scmp.ne.s32.totalorder %s336, %s339
      %p345 = scmp.eq.s32.totalorder %s20, 0
      %p346 = por %p344, %p345
      %p347 = scmp.ne.s32.totalorder %s336, %s339
      %p348 = scmp.eq.s32.totalorder %s25, 7
      %p349 = por %p347, %p348
      %p350 = scmp.ne.s32.totalorder %s339, %s340
      %p351 = scmp.eq.s32.totalorder %s25, 0
      %p352 = por %p350, %p351
      %p353 = scmp.ne.s32.totalorder %s339, %s340
      %p354 = scmp.eq.s32.totalorder %s26, 7
      %p355 = por %p353, %p354
      %p357 = scmp.ne.s32.totalorder %s340, %s356
      %p358 = scmp.eq.s32.totalorder %s26, 0
      %p359 = por %p357, %p358
      %p360 = scmp.le.s32.totalorder 1, %s20
      %p361 = scmp.lt.s32.totalorder %s20, 9
      %p362 = pnand %p360, %p361
      %p363 = pneg %p362
      // Predicated region
      $region9: #{clip_attention_mkv_pallas.1} parent=5 // pred_check
        _
      $region10: #{clip_attention_mkv_pallas.1} parent=5 // pred_check_branch
        %365 = sbr.rel (%p362) target = $region12
      $region11: #{clip_attention_mkv_pallas.1} parent=5 // pred_region
        %s366 = ssub.s32 %s20, 1
        // Predicated region
        $region13: #{clip_attention_mkv_pallas.1} parent=11 // pred_check
          %p367 = pneg %p324
        $region14: #{clip_attention_mkv_pallas.1} parent=11 // pred_check_branch
          %369 = sbr.rel (%p367) target = $region16
        $region15: #{clip_attention_mkv_pallas.1} parent=11 // pred_region
          _
        $region16: #{clip_attention_mkv_pallas.1} parent=11 // pred_fallthru
          _
      $region12: #{clip_attention_mkv_pallas.1} parent=5 // pred_fallthru
        _
      %p370 = scmp.lt.s32.totalorder %s20, 8
      // Predicated region
      $region17: #{clip_attention_mkv_pallas.1} parent=5 // pred_check
        %p371 = pneg %p370
      $region18: #{clip_attention_mkv_pallas.1} parent=5 // pred_check_branch
        %373 = sbr.rel (%p371) target = $region20
      $region19: #{clip_attention_mkv_pallas.1} parent=5 // pred_region
        // Predicated region
        $region21: #{clip_attention_mkv_pallas.1} parent=19 // pred_check
          %p374 = pneg %p61
        $region22: #{clip_attention_mkv_pallas.1} parent=19 // pred_check_branch
          %376 = sbr.rel (%p374) target = $region24
        $region23: #{clip_attention_mkv_pallas.1} parent=19 // pred_region
          %p377 = scmp.lt.s32.totalorder %s27, 1
          %s378 = scalar_select %p377, %s27, 1
          %p379 = scmp.lt.s32.totalorder %s28, 0
          %s380 = scalar_select %p379, %s28, 0
          %s381 = sadd.s32 %s380, %s378
          %s382 = smul.addr %s381, 8
          %s383 = scalar_lea.vmem %s0, %s382
        $region24: #{clip_attention_mkv_pallas.1} parent=19 // pred_fallthru
          _
        // Predicated region
        $region25: #{clip_attention_mkv_pallas.1} parent=19 // pred_check
          %p384 = pneg %p87
        $region26: #{clip_attention_mkv_pallas.1} parent=19 // pred_check_branch
          %386 = sbr.rel (%p384) target = $region28
        $region27: #{clip_attention_mkv_pallas.1} parent=19 // pred_region
          %p387 = scmp.lt.s32.totalorder %s27, 1
          %s388 = scalar_select %p387, %s27, 1
          %s389 = smul.addr %s388, 8
          %s390 = scalar_lea.vmem %s1, %s389
        $region28: #{clip_attention_mkv_pallas.1} parent=19 // pred_fallthru
          _
        // Predicated region
        $region29: #{clip_attention_mkv_pallas.1} parent=19 // pred_check
          %p391 = pneg %p115
        $region30: #{clip_attention_mkv_pallas.1} parent=19 // pred_check_branch
          %393 = sbr.rel (%p391) target = $region32
        $region31: #{clip_attention_mkv_pallas.1} parent=19 // pred_region
          %p394 = scmp.lt.s32.totalorder %s27, 1
          %s395 = scalar_select %p394, %s27, 1
          %p396 = scmp.lt.s32.totalorder %s28, 0
          %s397 = scalar_select %p396, %s28, 0
          %s398 = sadd.s32 %s397, %s395
          %s399 = smul.addr %s398, 8
          %s400 = scalar_lea.vmem %s2, %s399
        $region32: #{clip_attention_mkv_pallas.1} parent=19 // pred_fallthru
          _
        // Predicated region
        $region33: #{clip_attention_mkv_pallas.1} parent=19 // pred_check
          %p401 = pneg %p141
        $region34: #{clip_attention_mkv_pallas.1} parent=19 // pred_check_branch
          %403 = sbr.rel (%p401) target = $region36
        $region35: #{clip_attention_mkv_pallas.1} parent=19 // pred_region
          %p404 = scmp.lt.s32.totalorder %s29, 3
          %s405 = scalar_select %p404, %s29, 3
          %s406 = smul.addr %s405, 4
          %s407 = smul.addr %s406, 8
          %s408 = scalar_lea.vmem %s3, %s407
        $region36: #{clip_attention_mkv_pallas.1} parent=19 // pred_fallthru
          _
        // Predicated region
        $region37: #{clip_attention_mkv_pallas.1} parent=19 // pred_check
          %p409 = pneg %p167
        $region38: #{clip_attention_mkv_pallas.1} parent=19 // pred_check_branch
          %411 = sbr.rel (%p409) target = $region40
        $region39: #{clip_attention_mkv_pallas.1} parent=19 // pred_region
          %p412 = scmp.lt.s32.totalorder %s29, 3
          %s413 = scalar_select %p412, %s29, 3
          %s414 = scalar_lea.vmem %s4, %s413
        $region40: #{clip_attention_mkv_pallas.1} parent=19 // pred_fallthru
          _
        // Predicated region
        $region41: #{clip_attention_mkv_pallas.1} parent=19 // pred_check
          %p415 = pneg %p193
        $region42: #{clip_attention_mkv_pallas.1} parent=19 // pred_check_branch
          %417 = sbr.rel (%p415) target = $region44
        $region43: #{clip_attention_mkv_pallas.1} parent=19 // pred_region
          %p418 = scmp.lt.s32.totalorder %s29, 3
          %s419 = scalar_select %p418, %s29, 3
          %s420 = smul.addr %s419, 4
          %s421 = smul.addr %s420, 8
          %s422 = scalar_lea.vmem %s5, %s421
        $region44: #{clip_attention_mkv_pallas.1} parent=19 // pred_fallthru
          _
        // Predicated region
        $region45: #{clip_attention_mkv_pallas.1} parent=19 // pred_check
          %p423 = pneg %p219
        $region46: #{clip_attention_mkv_pallas.1} parent=19 // pred_check_branch
          %425 = sbr.rel (%p423) target = $region48
        $region47: #{clip_attention_mkv_pallas.1} parent=19 // pred_region
          %p426 = scmp.lt.s32.totalorder %s29, 3
          %s427 = scalar_select %p426, %s29, 3
          %s428 = scalar_lea.vmem %s6, %s427
        $region48: #{clip_attention_mkv_pallas.1} parent=19 // pred_fallthru
          _
        // Predicated region
        $region49: #{clip_attention_mkv_pallas.1} parent=19 // pred_check
          %p429 = pneg %p245
        $region50: #{clip_attention_mkv_pallas.1} parent=19 // pred_check_branch
          %431 = sbr.rel (%p429) target = $region52
        $region51: #{clip_attention_mkv_pallas.1} parent=19 // pred_region
          %p432 = scmp.lt.s32.totalorder %s29, 3
          %s433 = scalar_select %p432, %s29, 3
          %s434 = smul.addr %s433, 4
          %s435 = smul.addr %s434, 8
          %s436 = scalar_lea.vmem %s7, %s435
        $region52: #{clip_attention_mkv_pallas.1} parent=19 // pred_fallthru
          _
        // Predicated region
        $region53: #{clip_attention_mkv_pallas.1} parent=19 // pred_check
          %p437 = pneg %p271
        $region54: #{clip_attention_mkv_pallas.1} parent=19 // pred_check_branch
          %439 = sbr.rel (%p437) target = $region56
        $region55: #{clip_attention_mkv_pallas.1} parent=19 // pred_region
          %p440 = scmp.lt.s32.totalorder %s29, 3
          %s441 = scalar_select %p440, %s29, 3
          %s442 = scalar_lea.vmem %s8, %s441
        $region56: #{clip_attention_mkv_pallas.1} parent=19 // pred_fallthru
          _
        // Predicated region
        $region57: #{clip_attention_mkv_pallas.1} parent=19 // pred_check
          %p443 = pneg %p297
        $region58: #{clip_attention_mkv_pallas.1} parent=19 // pred_check_branch
          %445 = sbr.rel (%p443) target = $region60
        $region59: #{clip_attention_mkv_pallas.1} parent=19 // pred_region
          %p446 = scmp.lt.s32.totalorder %s29, 3
          %s447 = scalar_select %p446, %s29, 3
          %s448 = smul.addr %s447, 8
          %s449 = scalar_lea.vmem %s9, %s448
        $region60: #{clip_attention_mkv_pallas.1} parent=19 // pred_fallthru
          _
      $region20: #{clip_attention_mkv_pallas.1} parent=5 // pred_fallthru
        _
      %p450 = scmp.le.s32.totalorder 1, %s20
      %p451 = scmp.lt.s32.totalorder %s20, 9
      %p452 = pnand %p450, %p451
      %p453 = pneg %p452
      // Predicated region
      $region61: #{clip_attention_mkv_pallas.1} parent=5 // pred_check
        _
      $region62: #{clip_attention_mkv_pallas.1} parent=5 // pred_check_branch
        %455 = sbr.rel (%p452) target = $region64
      $region63: #{clip_attention_mkv_pallas.1} parent=5 // pred_region
        %s456 = ssub.s32 %s20, 1
        %p457 = scmp.lt.s32.totalorder %s30, 1
        %s458 = scalar_select %p457, %s30, 1
        %p459 = scmp.lt.s32.totalorder %s31, 0
        %s460 = scalar_select %p459, %s31, 0
        %s461 = sadd.s32 %s460, %s458
        %s462 = smul.addr %s461, 8
        %s463 = scalar_lea.vmem %s0, %s462
        %p464 = pneg %p67
        %p465 = pneg %p64
        %p466 = scmp.lt.s32.totalorder %s30, 1
        %s467 = scalar_select %p466, %s30, 1
        %s468 = smul.addr %s467, 8
        %s469 = scalar_lea.vmem %s1, %s468
        %p470 = pneg %p93
        %p471 = pneg %p90
        %p472 = scmp.lt.s32.totalorder %s30, 1
        %s473 = scalar_select %p472, %s30, 1
        %p474 = scmp.lt.s32.totalorder %s31, 0
        %s475 = scalar_select %p474, %s31, 0
        %s476 = sadd.s32 %s475, %s473
        %s477 = smul.addr %s476, 8
        %s478 = scalar_lea.vmem %s2, %s477
        %p479 = pneg %p121
        %p480 = pneg %p118
        %p481 = scmp.lt.s32.totalorder %s32, 3
        %s482 = scalar_select %p481, %s32, 3
        %s483 = smul.addr %s482, 4
        %s484 = smul.addr %s483, 8
        %s485 = scalar_lea.vmem %s3, %s484
        %p486 = pneg %p147
        %p487 = pneg %p144
        %p488 = scmp.lt.s32.totalorder %s32, 3
        %s489 = scalar_select %p488, %s32, 3
        %s490 = scalar_lea.vmem %s4, %s489
        %p491 = pneg %p173
        %p492 = pneg %p170
        %p493 = scmp.lt.s32.totalorder %s32, 3
        %s494 = scalar_select %p493, %s32, 3
        %s495 = smul.addr %s494, 4
        %s496 = smul.addr %s495, 8
        %s497 = scalar_lea.vmem %s5, %s496
        %p498 = pneg %p199
        %p499 = pneg %p196
        %p500 = scmp.lt.s32.totalorder %s32, 3
        %s501 = scalar_select %p500, %s32, 3
        %s502 = scalar_lea.vmem %s6, %s501
        %p503 = pneg %p225
        %p504 = pneg %p222
        %p505 = scmp.lt.s32.totalorder %s32, 3
        %s506 = scalar_select %p505, %s32, 3
        %s507 = smul.addr %s506, 4
        %s508 = smul.addr %s507, 8
        %s509 = scalar_lea.vmem %s7, %s508
        %p510 = pneg %p251
        %p511 = pneg %p248
        %p512 = scmp.lt.s32.totalorder %s32, 3
        %s513 = scalar_select %p512, %s32, 3
        %s514 = scalar_lea.vmem %s8, %s513
        %p515 = pneg %p277
        %p516 = pneg %p274
        %p517 = scmp.lt.s32.totalorder %s32, 3
        %s518 = scalar_select %p517, %s32, 3
        %s519 = smul.addr %s518, 8
        %s520 = scalar_lea.vmem %s9, %s519
        %p521 = pneg %p303
        %p522 = pneg %p300
        %p523 = pneg %p324
        %p524 = pneg %p321
        %p525 = pneg %p352
        %p526 = pneg %p349
        %s527 = sand.u32 %s339, 1
        %s528 = scalar_lea.sflag [#allocation4], %s527
        %s529 = sand.u32 %s339, 1
        %s530 = smul.addr %s529, 8
        %s531 = scalar_lea.vmem [#allocation3], %s530
        %p532 = scmp.lt.s32.totalorder %s30, 1
        %s533 = scalar_select %p532, %s30, 1
        %p534 = scmp.lt.s32.totalorder %s31, 0
        %s535 = scalar_select %p534, %s31, 0
        %s536 = sadd.s32 %s535, %s533
        %s537 = smul.addr %s536, 8
        %s538 = scalar_lea.vmem %s0, %s537
        %p539 = scmp.lt.s32.totalorder %s30, 1
        %s540 = scalar_select %p539, %s30, 1
        %s541 = smul.addr %s540, 8
        %s542 = scalar_lea.vmem %s1, %s541
        %p543 = scmp.lt.s32.totalorder %s30, 1
        %s544 = scalar_select %p543, %s30, 1
        %p545 = scmp.lt.s32.totalorder %s31, 0
        %s546 = scalar_select %p545, %s31, 0
        %s547 = sadd.s32 %s546, %s544
        %s548 = smul.addr %s547, 8
        %s549 = scalar_lea.vmem %s2, %s548
        %p550 = scmp.lt.s32.totalorder %s32, 3
        %s551 = scalar_select %p550, %s32, 3
        %s552 = smul.addr %s551, 4
        %s553 = smul.addr %s552, 8
        %s554 = scalar_lea.vmem %s3, %s553
        %p555 = scmp.lt.s32.totalorder %s32, 3
        %s556 = scalar_select %p555, %s32, 3
        %s557 = scalar_lea.vmem %s4, %s556
        %p558 = scmp.lt.s32.totalorder %s32, 3
        %s559 = scalar_select %p558, %s32, 3
        %s560 = smul.addr %s559, 4
        %s561 = smul.addr %s560, 8
        %s562 = scalar_lea.vmem %s5, %s561
        %p563 = scmp.lt.s32.totalorder %s32, 3
        %s564 = scalar_select %p563, %s32, 3
        %s565 = scalar_lea.vmem %s6, %s564
        %p566 = scmp.lt.s32.totalorder %s32, 3
        %s567 = scalar_select %p566, %s32, 3
        %s568 = smul.addr %s567, 4
        %s569 = smul.addr %s568, 8
        %s570 = scalar_lea.vmem %s7, %s569
        %p571 = scmp.lt.s32.totalorder %s32, 3
        %s572 = scalar_select %p571, %s32, 3
        %s573 = scalar_lea.vmem %s8, %s572
        %p574 = scmp.lt.s32.totalorder %s32, 3
        %s575 = scalar_select %p574, %s32, 3
        %s576 = smul.addr %s575, 8
        %s577 = scalar_lea.vmem %s9, %s576
        %p578 = scmp.eq.s32.totalorder %s32, 0
        // Predicated region
        $region65: #{clip_attention_mkv_pallas.1} parent=63 // pred_check
          %p579 = pneg %p578
        $region66: #{clip_attention_mkv_pallas.1} parent=63 // pred_check_branch
          %581 = sbr.rel (%p579) target = $region68
        $region67: #{clip_attention_mkv_pallas.1} parent=63 // pred_region
          %vm582 = vcmask 261120
          %583 = vst.msk [vmem:[#allocation2] sm:$0xff] %vm582, 0.0
        $region68: #{clip_attention_mkv_pallas.1} parent=63 // pred_fallthru
          _
        %v584 = vld [vmem:[%s538] sm:$0xff]
        %v585 = vld [vmem:[%s542] sm:$0xff]
        %v586 = vld [vmem:[%s549] sm:$0xff]
        %v587 = vld [vmem:[%s554] sm:$0xff]
        %v588 = vld [vmem:[%s554 + $0x8] sm:$0xff]
        %v589 = vld [vmem:[%s554 + $0x10] sm:$0xff]
        %v590 = vld [vmem:[%s554 + $0x18] sm:$0xff]
        %v591 = vld [vmem:[%s557] sm:$0x1]
        %v593 = vlaneseq
        %v594 = vshrl.u32 %v593, 7
        %v595 = vsub.s32 0, %v594
        %v596 = vrot.slane %v591, %v595
        %vm598 = vcmask 261120
        %v600 = vsel %vm598, %v584, 0
        %602 = vmatprep.subr.mxu0 0.0
        %603 = vmatpush1.msra.mxu0 0.0
        %604 = vmatprep.subr.mxu0 0.0
        %605 = vmatpush1.msra.mxu0 0.0
        %606 = vmatprep.subr.mxu0 0.0
        %607 = vmatpush1.msra.mxu0 0.0
        %608 = vmatprep.subr.mxu0 0.0
        %609 = vmatpush1.msra.mxu0 0.0
        %610 = vmatprep.subr.mxu0 0.0
        %611 = vmatpush1.msra.mxu0 0.0
        %612 = vmatprep.subr.mxu0 0.0
        %613 = vmatpush1.msra.mxu0 0.0
        %614 = vmatprep.subr.mxu0 0.0
        %615 = vmatpush1.msra.mxu0 0.0
        %616 = vmatprep.subr.mxu0 0.0
        %617 = vmatpush1.msra.mxu0 0.0
        %618 = vmatprep.subr.mxu0 0.0
        %619 = vmatpush1.msra.mxu0 0.0
        %620 = vmatprep.subr.mxu0 0.0
        %621 = vmatpush1.msra.mxu0 0.0
        %622 = vmatprep.subr.mxu0 0.0
        %623 = vmatpush1.msra.mxu0 0.0
        %624 = vmatprep.subr.mxu0 0.0
        %625 = vmatpush1.msra.mxu0 0.0
        %626 = vmatprep.subr.mxu0 0.0
        %627 = vmatpush1.msra.mxu0 %v590
        %628 = vmatprep.subr.mxu0 0.0
        %629 = vmatpush1.msra.mxu0 %v589
        %630 = vmatprep.subr.mxu0 0.0
        %631 = vmatpush1.msra.mxu0 %v588
        %632 = vmatprep.subr.mxu0 0.0
        %633 = vmatpush1.msra.mxu0 %v587
        %634 = vmatprep.subr.mxu0 0.0
        %635 = vmatpush2.msra.mxu0 0.0
        %636 = vmatprep.subr.mxu0 0.0
        %637 = vmatpush2.msra.mxu0 0.0
        %638 = vmatprep.subr.mxu0 0.0
        %639 = vmatpush2.msra.mxu0 0.0
        %640 = vmatprep.subr.mxu0 0.0
        %641 = vmatpush2.msra.mxu0 0.0
        %642 = vmatprep.subr.mxu0 0.0
        %643 = vmatpush2.msra.mxu0 0.0
        %644 = vmatprep.subr.mxu0 0.0
        %645 = vmatpush2.msra.mxu0 0.0
        %646 = vmatprep.subr.mxu0 0.0
        %647 = vmatpush2.msra.mxu0 0.0
        %648 = vmatprep.subr.mxu0 0.0
        %649 = vmatpush2.msra.mxu0 0.0
        %650 = vmatprep.subr.mxu0 0.0
        %651 = vmatpush2.msra.mxu0 0.0
        %652 = vmatprep.subr.mxu0 0.0
        %653 = vmatpush2.msra.mxu0 0.0
        %654 = vmatprep.subr.mxu0 0.0
        %655 = vmatpush2.msra.mxu0 0.0
        %656 = vmatprep.subr.mxu0 0.0
        %657 = vmatpush2.msra.mxu0 0.0
        %658 = vmatprep.subr.mxu0 0.0
        %659 = vmatpush2.msra.mxu0 0.0
        %660 = vmatprep.subr.mxu0 0.0
        %661 = vmatpush2.msra.mxu0 0.0
        %662 = vmatprep.subr.mxu0 0.0
        %663 = vmatpush2.msra.mxu0 0.0
        %664 = vmatprep.subr.mxu0 0.0
        %665 = vmatpush2.msra.mxu0 0.0
        %666 = vmatprep.mubr.f32.mxu0 0.0
        %667 = vmatmul.mubr.f32.gmra.mxu0 %v600
        %v668 = vpop.f32.mrf.mxu0
        %v669 = vadd.f32 %v596, %v668
        %v670 = vpop.f32.mrf.mxu0
        %671 = vdwg.mxu0
        %v672 = vld [vmem:[%s562] sm:$0xff]
        %v673 = vld [vmem:[%s562 + $0x8] sm:$0xff]
        %v674 = vld [vmem:[%s562 + $0x10] sm:$0xff]
        %v675 = vld [vmem:[%s562 + $0x18] sm:$0xff]
        %v676 = vld [vmem:[%s565] sm:$0x1]
        %v678 = vlaneseq
        %v679 = vshrl.u32 %v678, 7
        %v680 = vsub.s32 0, %v679
        %v681 = vrot.slane %v676, %v680
        %v684 = vsel %vm598, %v585, 0
        %686 = vmatprep.subr.mxu0 0.0
        %687 = vmatpush1.msra.mxu0 0.0
        %688 = vmatprep.subr.mxu0 0.0
        %689 = vmatpush1.msra.mxu0 0.0
        %690 = vmatprep.subr.mxu0 0.0
        %691 = vmatpush1.msra.mxu0 0.0
        %692 = vmatprep.subr.mxu0 0.0
        %693 = vmatpush1.msra.mxu0 0.0
        %694 = vmatprep.subr.mxu0 0.0
        %695 = vmatpush1.msra.mxu0 0.0
        %696 = vmatprep.subr.mxu0 0.0
        %697 = vmatpush1.msra.mxu0 0.0
        %698 = vmatprep.subr.mxu0 0.0
        %699 = vmatpush1.msra.mxu0 0.0
        %700 = vmatprep.subr.mxu0 0.0
        %701 = vmatpush1.msra.mxu0 0.0
        %702 = vmatprep.subr.mxu0 0.0
        %703 = vmatpush1.msra.mxu0 0.0
        %704 = vmatprep.subr.mxu0 0.0
        %705 = vmatpush1.msra.mxu0 0.0
        %706 = vmatprep.subr.mxu0 0.0
        %707 = vmatpush1.msra.mxu0 0.0
        %708 = vmatprep.subr.mxu0 0.0
        %709 = vmatpush1.msra.mxu0 0.0
        %710 = vmatprep.subr.mxu0 0.0
        %711 = vmatpush1.msra.mxu0 %v675
        %712 = vmatprep.subr.mxu0 0.0
        %713 = vmatpush1.msra.mxu0 %v674
        %714 = vmatprep.subr.mxu0 0.0
        %715 = vmatpush1.msra.mxu0 %v673
        %716 = vmatprep.subr.mxu0 0.0
        %717 = vmatpush1.msra.mxu0 %v672
        %718 = vmatprep.subr.mxu0 0.0
        %719 = vmatpush2.msra.mxu0 0.0
        %720 = vmatprep.subr.mxu0 0.0
        %721 = vmatpush2.msra.mxu0 0.0
        %722 = vmatprep.subr.mxu0 0.0
        %723 = vmatpush2.msra.mxu0 0.0
        %724 = vmatprep.subr.mxu0 0.0
        %725 = vmatpush2.msra.mxu0 0.0
        %726 = vmatprep.subr.mxu0 0.0
        %727 = vmatpush2.msra.mxu0 0.0
        %728 = vmatprep.subr.mxu0 0.0
        %729 = vmatpush2.msra.mxu0 0.0
        %730 = vmatprep.subr.mxu0 0.0
        %731 = vmatpush2.msra.mxu0 0.0
        %732 = vmatprep.subr.mxu0 0.0
        %733 = vmatpush2.msra.mxu0 0.0
        %734 = vmatprep.subr.mxu0 0.0
        %735 = vmatpush2.msra.mxu0 0.0
        %736 = vmatprep.subr.mxu0 0.0
        %737 = vmatpush2.msra.mxu0 0.0
        %738 = vmatprep.subr.mxu0 0.0
        %739 = vmatpush2.msra.mxu0 0.0
        %740 = vmatprep.subr.mxu0 0.0
        %741 = vmatpush2.msra.mxu0 0.0
        %742 = vmatprep.subr.mxu0 0.0
        %743 = vmatpush2.msra.mxu0 0.0
        %744 = vmatprep.subr.mxu0 0.0
        %745 = vmatpush2.msra.mxu0 0.0
        %746 = vmatprep.subr.mxu0 0.0
        %747 = vmatpush2.msra.mxu0 0.0
        %748 = vmatprep.subr.mxu0 0.0
        %749 = vmatpush2.msra.mxu0 0.0
        %750 = vmatprep.mubr.f32.mxu0 0.0
        %751 = vmatmul.mubr.f32.gmra.mxu0 %v684
        %v752 = vpop.f32.mrf.mxu0
        %v753 = vadd.f32 %v681, %v752
        %v754 = vpop.f32.mrf.mxu0
        %755 = vdwg.mxu0
        %v756 = vld [vmem:[%s570] sm:$0xff]
        %v757 = vld [vmem:[%s570 + $0x8] sm:$0xff]
        %v758 = vld [vmem:[%s570 + $0x10] sm:$0xff]
        %v759 = vld [vmem:[%s570 + $0x18] sm:$0xff]
        %v760 = vld [vmem:[%s573] sm:$0x1]
        %v762 = vlaneseq
        %v763 = vshrl.u32 %v762, 7
        %v764 = vsub.s32 0, %v763
        %v765 = vrot.slane %v760, %v764
        %767 = vmatprep.subr.mxu0 0.0
        %768 = vmatpush1.msra.mxu0 0.0
        %769 = vmatprep.subr.mxu0 0.0
        %770 = vmatpush1.msra.mxu0 0.0
        %771 = vmatprep.subr.mxu0 0.0
        %772 = vmatpush1.msra.mxu0 0.0
        %773 = vmatprep.subr.mxu0 0.0
        %774 = vmatpush1.msra.mxu0 0.0
        %775 = vmatprep.subr.mxu0 0.0
        %776 = vmatpush1.msra.mxu0 0.0
        %777 = vmatprep.subr.mxu0 0.0
        %778 = vmatpush1.msra.mxu0 0.0
        %779 = vmatprep.subr.mxu0 0.0
        %780 = vmatpush1.msra.mxu0 0.0
        %781 = vmatprep.subr.mxu0 0.0
        %782 = vmatpush1.msra.mxu0 0.0
        %783 = vmatprep.subr.mxu0 0.0
        %784 = vmatpush1.msra.mxu0 0.0
        %785 = vmatprep.subr.mxu0 0.0
        %786 = vmatpush1.msra.mxu0 0.0
        %787 = vmatprep.subr.mxu0 0.0
        %788 = vmatpush1.msra.mxu0 0.0
        %789 = vmatprep.subr.mxu0 0.0
        %790 = vmatpush1.msra.mxu0 0.0
        %791 = vmatprep.subr.mxu0 0.0
        %792 = vmatpush1.msra.mxu0 %v759
        %793 = vmatprep.subr.mxu0 0.0
        %794 = vmatpush1.msra.mxu0 %v758
        %795 = vmatprep.subr.mxu0 0.0
        %796 = vmatpush1.msra.mxu0 %v757
        %797 = vmatprep.subr.mxu0 0.0
        %798 = vmatpush1.msra.mxu0 %v756
        %799 = vmatprep.subr.mxu0 0.0
        %800 = vmatpush2.msra.mxu0 0.0
        %801 = vmatprep.subr.mxu0 0.0
        %802 = vmatpush2.msra.mxu0 0.0
        %803 = vmatprep.subr.mxu0 0.0
        %804 = vmatpush2.msra.mxu0 0.0
        %805 = vmatprep.subr.mxu0 0.0
        %806 = vmatpush2.msra.mxu0 0.0
        %807 = vmatprep.subr.mxu0 0.0
        %808 = vmatpush2.msra.mxu0 0.0
        %809 = vmatprep.subr.mxu0 0.0
        %810 = vmatpush2.msra.mxu0 0.0
        %811 = vmatprep.subr.mxu0 0.0
        %812 = vmatpush2.msra.mxu0 0.0
        %813 = vmatprep.subr.mxu0 0.0
        %814 = vmatpush2.msra.mxu0 0.0
        %815 = vmatprep.subr.mxu0 0.0
        %816 = vmatpush2.msra.mxu0 0.0
        %817 = vmatprep.subr.mxu0 0.0
        %818 = vmatpush2.msra.mxu0 0.0
        %819 = vmatprep.subr.mxu0 0.0
        %820 = vmatpush2.msra.mxu0 0.0
        %821 = vmatprep.subr.mxu0 0.0
        %822 = vmatpush2.msra.mxu0 0.0
        %823 = vmatprep.subr.mxu0 0.0
        %824 = vmatpush2.msra.mxu0 0.0
        %825 = vmatprep.subr.mxu0 0.0
        %826 = vmatpush2.msra.mxu0 0.0
        %827 = vmatprep.subr.mxu0 0.0
        %828 = vmatpush2.msra.mxu0 0.0
        %829 = vmatprep.subr.mxu0 0.0
        %830 = vmatpush2.msra.mxu0 0.0
        %831 = vmatprep.mubr.f32.mxu0 0.0
        %832 = vmatmul.mubr.f32.gmra.mxu0 %v684
        %v833 = vpop.f32.mrf.mxu0
        %v834 = vadd.f32 %v765, %v833
        %v835 = vpop.f32.mrf.mxu0
        %836 = vdwg.mxu0
        %vm837 = vcmask 64512
        %v839 = vsel %vm837, %v669, 0
        %v842 = vsel %vm837, %v753, 0
        %844 = vmatprep.subr.mxu0 0.0
        %845 = vmatpush1.xpose.msra.mxu0 0.0
        %846 = vmatprep.subr.mxu0 0.0
        %847 = vmatpush1.xpose.msra.mxu0 0.0
        %848 = vmatprep.subr.mxu0 0.0
        %849 = vmatpush1.xpose.msra.mxu0 0.0
        %850 = vmatprep.subr.mxu0 0.0
        %851 = vmatpush1.xpose.msra.mxu0 0.0
        %852 = vmatprep.subr.mxu0 0.0
        %853 = vmatpush1.xpose.msra.mxu0 0.0
        %854 = vmatprep.subr.mxu0 0.0
        %855 = vmatpush1.xpose.msra.mxu0 0.0
        %856 = vmatprep.subr.mxu0 0.0
        %857 = vmatpush1.xpose.msra.mxu0 0.0
        %858 = vmatprep.subr.mxu0 0.0
        %859 = vmatpush1.xpose.msra.mxu0 0.0
        %860 = vmatprep.subr.mxu0 0.0
        %861 = vmatpush1.xpose.msra.mxu0 0.0
        %862 = vmatprep.subr.mxu0 0.0
        %863 = vmatpush1.xpose.msra.mxu0 0.0
        %864 = vmatprep.subr.mxu0 0.0
        %865 = vmatpush1.xpose.msra.mxu0 0.0
        %866 = vmatprep.subr.mxu0 0.0
        %867 = vmatpush1.xpose.msra.mxu0 0.0
        %868 = vmatprep.subr.mxu0 0.0
        %869 = vmatpush1.xpose.msra.mxu0 0.0
        %870 = vmatprep.subr.mxu0 0.0
        %871 = vmatpush1.xpose.msra.mxu0 0.0
        %872 = vmatprep.subr.mxu0 0.0
        %873 = vmatpush1.xpose.msra.mxu0 0.0
        %874 = vmatprep.subr.mxu0 0.0
        %875 = vmatpush1.xpose.msra.mxu0 %v842
        %876 = vmatprep.subr.mxu0 0.0
        %877 = vmatpush2.xpose.msra.mxu0 0.0
        %878 = vmatprep.subr.mxu0 0.0
        %879 = vmatpush2.xpose.msra.mxu0 0.0
        %880 = vmatprep.subr.mxu0 0.0
        %881 = vmatpush2.xpose.msra.mxu0 0.0
        %882 = vmatprep.subr.mxu0 0.0
        %883 = vmatpush2.xpose.msra.mxu0 0.0
        %884 = vmatprep.subr.mxu0 0.0
        %885 = vmatpush2.xpose.msra.mxu0 0.0
        %886 = vmatprep.subr.mxu0 0.0
        %887 = vmatpush2.xpose.msra.mxu0 0.0
        %888 = vmatprep.subr.mxu0 0.0
        %889 = vmatpush2.xpose.msra.mxu0 0.0
        %890 = vmatprep.subr.mxu0 0.0
        %891 = vmatpush2.xpose.msra.mxu0 0.0
        %892 = vmatprep.subr.mxu0 0.0
        %893 = vmatpush2.xpose.msra.mxu0 0.0
        %894 = vmatprep.subr.mxu0 0.0
        %895 = vmatpush2.xpose.msra.mxu0 0.0
        %896 = vmatprep.subr.mxu0 0.0
        %897 = vmatpush2.xpose.msra.mxu0 0.0
        %898 = vmatprep.subr.mxu0 0.0
        %899 = vmatpush2.xpose.msra.mxu0 0.0
        %900 = vmatprep.subr.mxu0 0.0
        %901 = vmatpush2.xpose.msra.mxu0 0.0
        %902 = vmatprep.subr.mxu0 0.0
        %903 = vmatpush2.xpose.msra.mxu0 0.0
        %904 = vmatprep.subr.mxu0 0.0
        %905 = vmatpush2.xpose.msra.mxu0 0.0
        %906 = vmatprep.subr.mxu0 0.0
        %907 = vmatpush2.xpose.msra.mxu0 0.0
        %908 = vmatprep.mubr.f32.mxu0 0.0
        %909 = vmatmul.mubr.f32.gmra.mxu0 %v839
        %v910 = vpop.f32.mrf.mxu0
        %v911 = vadd.f32 %v586, %v910
        %v912 = vpop.f32.mrf.mxu0
        %913 = vdwg.mxu0
        %914 = vrot.lane.b32.xlu0 %v753, 120
        %v915 = vpop.permute.xlu0 %914
        %v916 = vsel %vm837, %v915, 0
        %918 = vmatprep.subr.mxu0 0.0
        %919 = vmatpush1.xpose.msra.mxu0 0.0
        %920 = vmatprep.subr.mxu0 0.0
        %921 = vmatpush1.xpose.msra.mxu0 0.0
        %922 = vmatprep.subr.mxu0 0.0
        %923 = vmatpush1.xpose.msra.mxu0 0.0
        %924 = vmatprep.subr.mxu0 0.0
        %925 = vmatpush1.xpose.msra.mxu0 0.0
        %926 = vmatprep.subr.mxu0 0.0
        %927 = vmatpush1.xpose.msra.mxu0 0.0
        %928 = vmatprep.subr.mxu0 0.0
        %929 = vmatpush1.xpose.msra.mxu0 0.0
        %930 = vmatprep.subr.mxu0 0.0
        %931 = vmatpush1.xpose.msra.mxu0 0.0
        %932 = vmatprep.subr.mxu0 0.0
        %933 = vmatpush1.xpose.msra.mxu0 0.0
        %934 = vmatprep.subr.mxu0 0.0
        %935 = vmatpush1.xpose.msra.mxu0 0.0
        %936 = vmatprep.subr.mxu0 0.0
        %937 = vmatpush1.xpose.msra.mxu0 0.0
        %938 = vmatprep.subr.mxu0 0.0
        %939 = vmatpush1.xpose.msra.mxu0 0.0
        %940 = vmatprep.subr.mxu0 0.0
        %941 = vmatpush1.xpose.msra.mxu0 0.0
        %942 = vmatprep.subr.mxu0 0.0
        %943 = vmatpush1.xpose.msra.mxu0 0.0
        %944 = vmatprep.subr.mxu0 0.0
        %945 = vmatpush1.xpose.msra.mxu0 0.0
        %946 = vmatprep.subr.mxu0 0.0
        %947 = vmatpush1.xpose.msra.mxu0 0.0
        %948 = vmatprep.subr.mxu0 0.0
        %949 = vmatpush1.xpose.msra.mxu0 %v916
        %950 = vmatprep.subr.mxu0 0.0
        %951 = vmatpush2.xpose.msra.mxu0 0.0
        %952 = vmatprep.subr.mxu0 0.0
        %953 = vmatpush2.xpose.msra.mxu0 0.0
        %954 = vmatprep.subr.mxu0 0.0
        %955 = vmatpush2.xpose.msra.mxu0 0.0
        %956 = vmatprep.subr.mxu0 0.0
        %957 = vmatpush2.xpose.msra.mxu0 0.0
        %958 = vmatprep.subr.mxu0 0.0
        %959 = vmatpush2.xpose.msra.mxu0 0.0
        %960 = vmatprep.subr.mxu0 0.0
        %961 = vmatpush2.xpose.msra.mxu0 0.0
        %962 = vmatprep.subr.mxu0 0.0
        %963 = vmatpush2.xpose.msra.mxu0 0.0
        %964 = vmatprep.subr.mxu0 0.0
        %965 = vmatpush2.xpose.msra.mxu0 0.0
        %966 = vmatprep.subr.mxu0 0.0
        %967 = vmatpush2.xpose.msra.mxu0 0.0
        %968 = vmatprep.subr.mxu0 0.0
        %969 = vmatpush2.xpose.msra.mxu0 0.0
        %970 = vmatprep.subr.mxu0 0.0
        %971 = vmatpush2.xpose.msra.mxu0 0.0
        %972 = vmatprep.subr.mxu0 0.0
        %973 = vmatpush2.xpose.msra.mxu0 0.0
        %974 = vmatprep.subr.mxu0 0.0
        %975 = vmatpush2.xpose.msra.mxu0 0.0
        %976 = vmatprep.subr.mxu0 0.0
        %977 = vmatpush2.xpose.msra.mxu0 0.0
        %978 = vmatprep.subr.mxu0 0.0
        %979 = vmatpush2.xpose.msra.mxu0 0.0
        %980 = vmatprep.subr.mxu0 0.0
        %981 = vmatpush2.xpose.msra.mxu0 0.0
        %982 = vmatprep.mubr.f32.mxu0 0.0
        %983 = vmatmul.mubr.f32.gmra.mxu0 %v839
        %v984 = vpop.f32.mrf.mxu0
        %v985 = vadd.f32 %v586, %v984
        %v986 = vpop.f32.mrf.mxu0
        %987 = vdwg.mxu0
        %v988 = vsel %vm837, %v911, -inf
        %989 = vmax.xlane.f32.xlu0 %v988
        %v990 = vpop.xlane.xlu0 %989
        %v991 = vsel %vm837, %v985, -inf
        %992 = vmax.xlane.f32.xlu0 %v991
        %v993 = vpop.xlane.xlu0 %992
        %v994 = vmax.f32 %v990, %v993
        %v995 = vsub.f32 %v911, %v994
        %v996 = vmul.f32 %v995, 1.442695
        %v997 = vpow.pop %v996
        %v998 = vsub.f32 %v985, %v994
        %v999 = vmul.f32 %v998, 1.442695
        %v1000 = vpow.pop %v999
        %v1001 = vsel %vm837, %v997, 0.0
        %1002 = vadd.xlane.f32.xlu0 %v1001
        %v1003 = vpop.xlane.xlu0 %1002
        %v1004 = vsel %vm837, %v1000, 0.0
        %1005 = vadd.xlane.f32.xlu0 %v1004
        %v1006 = vpop.xlane.xlu0 %1005
        %v1007 = vadd.f32 %v1003, %v1006
        %v1008 = vrcp.pop %v1007
        %1010 = vrot.lane.b32.xlu0 %v834, 120
        %v1011 = vpop.permute.xlu0 %1010
        %v1014 = vsel %vm837, %v1000, 0
        %1016 = vmatprep.subr.mxu0 0.0
        %1017 = vmatpush1.msra.mxu0 0.0
        %1018 = vmatprep.subr.mxu0 0.0
        %1019 = vmatpush1.msra.mxu0 0.0
        %1020 = vmatprep.subr.mxu0 0.0
        %1021 = vmatpush1.msra.mxu0 0.0
        %1022 = vmatprep.subr.mxu0 0.0
        %1023 = vmatpush1.msra.mxu0 0.0
        %1024 = vmatprep.subr.mxu0 0.0
        %1025 = vmatpush1.msra.mxu0 0.0
        %1026 = vmatprep.subr.mxu0 0.0
        %1027 = vmatpush1.msra.mxu0 0.0
        %1028 = vmatprep.subr.mxu0 0.0
        %1029 = vmatpush1.msra.mxu0 0.0
        %1030 = vmatprep.subr.mxu0 0.0
        %1031 = vmatpush1.msra.mxu0 0.0
        %1032 = vmatprep.subr.mxu0 0.0
        %1033 = vmatpush1.msra.mxu0 0.0
        %1034 = vmatprep.subr.mxu0 0.0
        %1035 = vmatpush1.msra.mxu0 0.0
        %1036 = vmatprep.subr.mxu0 0.0
        %1037 = vmatpush1.msra.mxu0 0.0
        %1038 = vmatprep.subr.mxu0 0.0
        %1039 = vmatpush1.msra.mxu0 0.0
        %1040 = vmatprep.subr.mxu0 0.0
        %1041 = vmatpush1.msra.mxu0 0.0
        %1042 = vmatprep.subr.mxu0 0.0
        %1043 = vmatpush1.msra.mxu0 0.0
        %1044 = vmatprep.subr.mxu0 0.0
        %1045 = vmatpush1.msra.mxu0 0.0
        %1046 = vmatprep.subr.mxu0 0.0
        %1047 = vmatpush1.msra.mxu0 %v1011
        %1048 = vmatprep.subr.mxu0 0.0
        %1049 = vmatpush2.msra.mxu0 0.0
        %1050 = vmatprep.subr.mxu0 0.0
        %1051 = vmatpush2.msra.mxu0 0.0
        %1052 = vmatprep.subr.mxu0 0.0
        %1053 = vmatpush2.msra.mxu0 0.0
        %1054 = vmatprep.subr.mxu0 0.0
        %1055 = vmatpush2.msra.mxu0 0.0
        %1056 = vmatprep.subr.mxu0 0.0
        %1057 = vmatpush2.msra.mxu0 0.0
        %1058 = vmatprep.subr.mxu0 0.0
        %1059 = vmatpush2.msra.mxu0 0.0
        %1060 = vmatprep.subr.mxu0 0.0
        %1061 = vmatpush2.msra.mxu0 0.0
        %1062 = vmatprep.subr.mxu0 0.0
        %1063 = vmatpush2.msra.mxu0 0.0
        %1064 = vmatprep.subr.mxu0 0.0
        %1065 = vmatpush2.msra.mxu0 0.0
        %1066 = vmatprep.subr.mxu0 0.0
        %1067 = vmatpush2.msra.mxu0 0.0
        %1068 = vmatprep.subr.mxu0 0.0
        %1069 = vmatpush2.msra.mxu0 0.0
        %1070 = vmatprep.subr.mxu0 0.0
        %1071 = vmatpush2.msra.mxu0 0.0
        %1072 = vmatprep.subr.mxu0 0.0
        %1073 = vmatpush2.msra.mxu0 0.0
        %1074 = vmatprep.subr.mxu0 0.0
        %1075 = vmatpush2.msra.mxu0 0.0
        %1076 = vmatprep.subr.mxu0 0.0
        %1077 = vmatpush2.msra.mxu0 0.0
        %1078 = vmatprep.subr.mxu0 0.0
        %1079 = vmatpush2.msra.mxu0 0.0
        %1080 = vmatprep.mubr.f32.mxu0 0.0
        %1081 = vmatmul.mubr.f32.gmra.mxu0 %v1014
        %v1082 = vpop.f32.mrf.mxu0
        %v1083 = vadd.f32 0.0, %v1082
        %v1084 = vpop.f32.mrf.mxu0
        %1085 = vdwg.mxu0
        %v1087 = vsel %vm837, %v997, 0
        %1089 = vmatprep.subr.mxu0 0.0
        %1090 = vmatpush1.msra.mxu0 0.0
        %1091 = vmatprep.subr.mxu0 0.0
        %1092 = vmatpush1.msra.mxu0 0.0
        %1093 = vmatprep.subr.mxu0 0.0
        %1094 = vmatpush1.msra.mxu0 0.0
        %1095 = vmatprep.subr.mxu0 0.0
        %1096 = vmatpush1.msra.mxu0 0.0
        %1097 = vmatprep.subr.mxu0 0.0
        %1098 = vmatpush1.msra.mxu0 0.0
        %1099 = vmatprep.subr.mxu0 0.0
        %1100 = vmatpush1.msra.mxu0 0.0
        %1101 = vmatprep.subr.mxu0 0.0
        %1102 = vmatpush1.msra.mxu0 0.0
        %1103 = vmatprep.subr.mxu0 0.0
        %1104 = vmatpush1.msra.mxu0 0.0
        %1105 = vmatprep.subr.mxu0 0.0
        %1106 = vmatpush1.msra.mxu0 0.0
        %1107 = vmatprep.subr.mxu0 0.0
        %1108 = vmatpush1.msra.mxu0 0.0
        %1109 = vmatprep.subr.mxu0 0.0
        %1110 = vmatpush1.msra.mxu0 0.0
        %1111 = vmatprep.subr.mxu0 0.0
        %1112 = vmatpush1.msra.mxu0 0.0
        %1113 = vmatprep.subr.mxu0 0.0
        %1114 = vmatpush1.msra.mxu0 0.0
        %1115 = vmatprep.subr.mxu0 0.0
        %1116 = vmatpush1.msra.mxu0 0.0
        %1117 = vmatprep.subr.mxu0 0.0
        %1118 = vmatpush1.msra.mxu0 0.0
        %1119 = vmatprep.subr.mxu0 0.0
        %1120 = vmatpush1.msra.mxu0 %v834
        %1121 = vmatprep.subr.mxu0 0.0
        %1122 = vmatpush2.msra.mxu0 0.0
        %1123 = vmatprep.subr.mxu0 0.0
        %1124 = vmatpush2.msra.mxu0 0.0
        %1125 = vmatprep.subr.mxu0 0.0
        %1126 = vmatpush2.msra.mxu0 0.0
        %1127 = vmatprep.subr.mxu0 0.0
        %1128 = vmatpush2.msra.mxu0 0.0
        %1129 = vmatprep.subr.mxu0 0.0
        %1130 = vmatpush2.msra.mxu0 0.0
        %1131 = vmatprep.subr.mxu0 0.0
        %1132 = vmatpush2.msra.mxu0 0.0
        %1133 = vmatprep.subr.mxu0 0.0
        %1134 = vmatpush2.msra.mxu0 0.0
        %1135 = vmatprep.subr.mxu0 0.0
        %1136 = vmatpush2.msra.mxu0 0.0
        %1137 = vmatprep.subr.mxu0 0.0
        %1138 = vmatpush2.msra.mxu0 0.0
        %1139 = vmatprep.subr.mxu0 0.0
        %1140 = vmatpush2.msra.mxu0 0.0
        %1141 = vmatprep.subr.mxu0 0.0
        %1142 = vmatpush2.msra.mxu0 0.0
        %1143 = vmatprep.subr.mxu0 0.0
        %1144 = vmatpush2.msra.mxu0 0.0
        %1145 = vmatprep.subr.mxu0 0.0
        %1146 = vmatpush2.msra.mxu0 0.0
        %1147 = vmatprep.subr.mxu0 0.0
        %1148 = vmatpush2.msra.mxu0 0.0
        %1149 = vmatprep.subr.mxu0 0.0
        %1150 = vmatpush2.msra.mxu0 0.0
        %1151 = vmatprep.subr.mxu0 0.0
        %1152 = vmatpush2.msra.mxu0 0.0
        %1153 = vmatprep.mubr.f32.mxu0 0.0
        %1154 = vmatmul.mubr.f32.gmra.mxu0 %v1087
        %v1155 = vpop.f32.mrf.mxu0
        %v1156 = vadd.f32 %v1083, %v1155
        %v1157 = vpop.f32.mrf.mxu0
        %1158 = vdwg.mxu0
        %v1159 = vmul.f32 %v1156, %v1008
        %v1160 = vld [vmem:[#allocation2] sm:$0xff]
        %v1161 = vld [vmem:[%s577] sm:$0xff]
        %v1163 = vsel %vm837, %v1159, 0
        %1165 = vmatprep.subr.mxu0 0.0
        %1166 = vmatpush1.msra.mxu0 0.0
        %1167 = vmatprep.subr.mxu0 0.0
        %1168 = vmatpush1.msra.mxu0 0.0
        %1169 = vmatprep.subr.mxu0 0.0
        %1170 = vmatpush1.msra.mxu0 0.0
        %1171 = vmatprep.subr.mxu0 0.0
        %1172 = vmatpush1.msra.mxu0 0.0
        %1173 = vmatprep.subr.mxu0 0.0
        %1174 = vmatpush1.msra.mxu0 0.0
        %1175 = vmatprep.subr.mxu0 0.0
        %1176 = vmatpush1.msra.mxu0 0.0
        %1177 = vmatprep.subr.mxu0 0.0
        %1178 = vmatpush1.msra.mxu0 0.0
        %1179 = vmatprep.subr.mxu0 0.0
        %1180 = vmatpush1.msra.mxu0 0.0
        %1181 = vmatprep.subr.mxu0 0.0
        %1182 = vmatpush1.msra.mxu0 0.0
        %1183 = vmatprep.subr.mxu0 0.0
        %1184 = vmatpush1.msra.mxu0 0.0
        %1185 = vmatprep.subr.mxu0 0.0
        %1186 = vmatpush1.msra.mxu0 0.0
        %1187 = vmatprep.subr.mxu0 0.0
        %1188 = vmatpush1.msra.mxu0 0.0
        %1189 = vmatprep.subr.mxu0 0.0
        %1190 = vmatpush1.msra.mxu0 0.0
        %1191 = vmatprep.subr.mxu0 0.0
        %1192 = vmatpush1.msra.mxu0 0.0
        %1193 = vmatprep.subr.mxu0 0.0
        %1194 = vmatpush1.msra.mxu0 0.0
        %1195 = vmatprep.subr.mxu0 0.0
        %1196 = vmatpush1.msra.mxu0 %v1161
        %1197 = vmatprep.subr.mxu0 0.0
        %1198 = vmatpush2.msra.mxu0 0.0
        %1199 = vmatprep.subr.mxu0 0.0
        %1200 = vmatpush2.msra.mxu0 0.0
        %1201 = vmatprep.subr.mxu0 0.0
        %1202 = vmatpush2.msra.mxu0 0.0
        %1203 = vmatprep.subr.mxu0 0.0
        %1204 = vmatpush2.msra.mxu0 0.0
        %1205 = vmatprep.subr.mxu0 0.0
        %1206 = vmatpush2.msra.mxu0 0.0
        %1207 = vmatprep.subr.mxu0 0.0
        %1208 = vmatpush2.msra.mxu0 0.0
        %1209 = vmatprep.subr.mxu0 0.0
        %1210 = vmatpush2.msra.mxu0 0.0
        %1211 = vmatprep.subr.mxu0 0.0
        %1212 = vmatpush2.msra.mxu0 0.0
        %1213 = vmatprep.subr.mxu0 0.0
        %1214 = vmatpush2.msra.mxu0 0.0
        %1215 = vmatprep.subr.mxu0 0.0
        %1216 = vmatpush2.msra.mxu0 0.0
        %1217 = vmatprep.subr.mxu0 0.0
        %1218 = vmatpush2.msra.mxu0 0.0
        %1219 = vmatprep.subr.mxu0 0.0
        %1220 = vmatpush2.msra.mxu0 0.0
        %1221 = vmatprep.subr.mxu0 0.0
        %1222 = vmatpush2.msra.mxu0 0.0
        %1223 = vmatprep.subr.mxu0 0.0
        %1224 = vmatpush2.msra.mxu0 0.0
        %1225 = vmatprep.subr.mxu0 0.0
        %1226 = vmatpush2.msra.mxu0 0.0
        %1227 = vmatprep.subr.mxu0 0.0
        %1228 = vmatpush2.msra.mxu0 0.0
        %1229 = vmatprep.mubr.f32.mxu0 0.0
        %1230 = vmatmul.mubr.f32.gmra.mxu0 %v1163
        %v1231 = vpop.f32.mrf.mxu0
        %v1232 = vadd.f32 0.0, %v1231
        %v1233 = vpop.f32.mrf.mxu0
        %1234 = vdwg.mxu0
        %v1235 = vadd.f32 %v1160, %v1232
        %1236 = vst.msk [vmem:[#allocation2] sm:$0xff] %vm598, %v1235
        %p1237 = scmp.eq.s32.totalorder %s32, 3
        // Predicated region
        $region69: #{clip_attention_mkv_pallas.1} parent=63 // pred_check
          %p1238 = pneg %p1237
        $region70: #{clip_attention_mkv_pallas.1} parent=63 // pred_check_branch
          %1240 = sbr.rel (%p1238) target = $region72
        $region71: #{clip_attention_mkv_pallas.1} parent=63 // pred_region
          %v1241 = vld [vmem:[#allocation2] sm:$0xff]
          %v1242 = vld [vmem:[%s10] sm:$0x1]
          %v1244 = vlaneseq
          %v1245 = vshrl.u32 %v1244, 7
          %v1246 = vsub.s32 0, %v1245
          %v1247 = vrot.slane %v1242, %v1246
          %v1249 = vadd.f32 %v1241, %v1247
          %1250 = vst.msk [vmem:[%s531] sm:$0xff] %vm598, %v1249
        $region72: #{clip_attention_mkv_pallas.1} parent=63 // pred_fallthru
          _
        %s1251 = sand.u32 %s339, 1
        %s1252 = scalar_lea.sflag [#allocation4], %s1251
        %s1253 = sand.u32 %s339, 1
        %s1254 = smul.addr %s1253, 8
        %s1255 = scalar_lea.vmem [#allocation3], %s1254
        // Predicated region
        $region73: #{clip_attention_mkv_pallas.1} parent=63 // pred_check
          %p1256 = pneg %p349
        $region74: #{clip_attention_mkv_pallas.1} parent=63 // pred_check_branch
          %1258 = sbr.rel (%p1256) target = $region76
        $region75: #{clip_attention_mkv_pallas.1} parent=63 // pred_region
          %s1260 = ssub.s32 128, 128
          %1261 = vsyncadd %s1252, %s1260
          %s1262 = sadd.s32 %s31, %s30
          %s1263 = smul.addr %s1262, 128
          %s1264 = scalar_lea.hbm %s11, %s1263
          %s1266 = sshll.u32 %s1255, 4
          %s1267 = int_to_ptr.vmem [resolvable:$true] %s1266
          %1269 = dma.vmem_to_hbm [thread:$0]  %s1267, 128, %s1264, %s1252
        $region76: #{clip_attention_mkv_pallas.1} parent=63 // pred_fallthru
          _
      $region64: #{clip_attention_mkv_pallas.1} parent=5 // pred_fallthru
        _
      %p1270 = scmp.le.s32.totalorder 2, %s20
      // Predicated region
      $region77: #{clip_attention_mkv_pallas.1} parent=5 // pred_check
        %p1271 = pneg %p1270
      $region78: #{clip_attention_mkv_pallas.1} parent=5 // pred_check_branch
        %1273 = sbr.rel (%p1271) target = $region80
      $region79: #{clip_attention_mkv_pallas.1} parent=5 // pred_region
        %s1274 = ssub.s32 %s20, 2
        // Predicated region
        $region81: #{clip_attention_mkv_pallas.1} parent=79 // pred_check
          %p1275 = pneg %p355
        $region82: #{clip_attention_mkv_pallas.1} parent=79 // pred_check_branch
          %1277 = sbr.rel (%p1275) target = $region84
        $region83: #{clip_attention_mkv_pallas.1} parent=79 // pred_region
          %s1278 = sand.u32 %s340, 1
          %s1279 = scalar_lea.sflag [#allocation4], %s1278
          %s1280 = sand.u32 %s340, 1
          %s1281 = smul.addr %s1280, 8
          %s1282 = scalar_lea.vmem [#allocation3], %s1281
          %1283 = dma.done %s1279, 128
        $region84: #{clip_attention_mkv_pallas.1} parent=79 // pred_fallthru
          _
      $region80: #{clip_attention_mkv_pallas.1} parent=5 // pred_fallthru
        _
    $region6: #{clip_attention_mkv_pallas.1} parent=1 // loop_footer
      %s24 = sadd.s32 1, %s20
    $region7: #{clip_attention_mkv_pallas.1} parent=1 // loop_footer_branch
      %19 = sbr.rel target = $region3
    $region8: #{clip_attention_mkv_pallas.1} parent=1 // loop_exit
      _
    %1284 = vsyncpa [#allocation4], 1
    %s1285 = scalar_lea.sflag [#allocation4], 1
    %1286 = vsyncpa %s1285, 1

</llo_original>
